<compile_context>
chip_gen: v5e
topology: v5e:2x2
jax: 0.10.0
libtpu: 0.0.40
codegen_flags: <defaults>
</compile_context>

<pallas_src>
import math
import jax
import jax.numpy as jnp
from jax.experimental import pallas as pl
from jax.experimental.pallas import tpu as pltpu


# --------------------------------------------------------------------------- kernel

def _res_classifier_kernel(x_ref, w1_ref, b1_ref, w2_ref, b2_ref,
                           emb_ref, logit_ref):
    """Grid = (batch_tiles,).  All params resident in VMEM.

    x_ref   : (tb, D)   bf16
    w1_ref  : (D, H)    bf16   (BN folded in)
    b1_ref  : (1, H)    f32    (BN folded in)
    w2_ref  : (H, Cp)   f32    (zero-padded to Cp lanes)
    b2_ref  : (1, Cp)   f32
    emb_ref : (tb, H)   f32 out
    logit_ref: (tb, Cp) f32 out
    """
    # fc1: bf16 x bf16 MXU matmul with f32 accumulation, then bias + ReLU.
    h = jnp.dot(x_ref[...], w1_ref[...], preferred_element_type=jnp.float32)
    h = jnp.maximum(h + b1_ref[...], 0.0)
    emb_ref[...] = h.astype(emb_ref.dtype)        # dropout is identity in eval mode

    # fc2 on the padded (lane-dense) class dimension.
    logit = jnp.dot(h, w2_ref[...], preferred_element_type=jnp.float32)
    logit_ref[...] = (logit + b2_ref[...]).astype(logit_ref.dtype)


# --------------------------------------------------------------------------- wrapper

def _round_up(x, m):
    return ((x + m - 1) // m) * m


def _ceil_div(a, b):
    return (a + b - 1) // b


def prepare_params(p, eps=1e-5):
    """Fold eval-mode BN into fc1, cast w1 to bf16, pad fc2 to 128 lanes."""
    scale = p["gamma"] * jax.lax.rsqrt(p["var"] + eps)          # (1, H)
    w1_folded = p["w1"] * scale                                  # (D, H)
    b1_folded = (p["b1"] - p["mean"]) * scale + p["beta"]        # (1, H)

    H, C = p["w2"].shape
    Cp = _round_up(max(C, 1), 128)
    w2_pad = jnp.zeros((H, Cp), jnp.float32).at[:, :C].set(p["w2"])
    b2_pad = jnp.zeros((1, Cp), jnp.float32).at[:, :C].set(p["b2"])

    return {
        "w1": w1_folded.astype(jnp.bfloat16),
        "b1": b1_folded.astype(jnp.float32),
        "w2": w2_pad,
        "b2": b2_pad,
        "n_classes": C,
    }


def _vmem_limit_bytes(tb, D, H, Cp):
    footprint = (
        2 * tb * D * 2        # x tiles (bf16, double-buffered)
        + D * H * 2           # w1 resident (bf16)
        + H * 4               # b1
        + H * Cp * 4          # w2 resident
        + Cp * 4              # b2
        + 2 * tb * H * 4      # emb output buffers
        + 2 * tb * Cp * 4     # logit output buffers
    )
    # ~2x honest headroom; tiny compared to any generation's VMEM.
    return int(min(max(2 * footprint, 4 << 20), 32 << 20))


def res_classifier_forward(x, prepped, *, block_b=128):
    """x: (B, 2048).  Returns (fc1_emb (B, H) f32, logit (B, n_classes) f32)."""
    B, D = x.shape
    H = prepped["w1"].shape[1]
    Cp = prepped["w2"].shape[1]
    C = prepped["n_classes"]

    # Batch tiling: >=2 tiles when the batch allows (v7x megacore), rows padded to 8.
    tb = max(8, min(block_b, _round_up(_ceil_div(B, 2), 8)))
    Bp = _round_up(B, tb)

    # Stream x as bf16 (dominant HBM traffic at large B; feeds the MXU natively).
    x = x.astype(jnp.bfloat16)
    if Bp != B:
        x = jnp.pad(x, ((0, Bp - B), (0, 0)))

    grid = (Bp // tb,)

    out = pl.pallas_call(
        _res_classifier_kernel,
        out_shape=[
            jax.ShapeDtypeStruct((Bp, H), jnp.float32),
            jax.ShapeDtypeStruct((Bp, Cp), jnp.float32),
        ],
        grid_spec=pltpu.PrefetchScalarGridSpec(
            num_scalar_prefetch=0,
            grid=grid,
            in_specs=[
                pl.BlockSpec((tb, D), lambda i: (i, 0)),   # x (bf16, streamed)
                pl.BlockSpec((D, H), lambda i: (0, 0)),    # w1 (bf16, resident)
                pl.BlockSpec((1, H), lambda i: (0, 0)),    # b1 (resident)
                pl.BlockSpec((H, Cp), lambda i: (0, 0)),   # w2 (resident)
                pl.BlockSpec((1, Cp), lambda i: (0, 0)),   # b2 (resident)
            ],
            out_specs=[
                pl.BlockSpec((tb, H), lambda i: (i, 0)),   # fc1_emb
                pl.BlockSpec((tb, Cp), lambda i: (i, 0)),  # logit (padded lanes)
            ],
        ),
        compiler_params=pltpu.CompilerParams(
            dimension_semantics=("parallel",),
            vmem_limit_bytes=_vmem_limit_bytes(tb, D, H, Cp),
        ),
    )(x, prepped["w1"], prepped["b1"], prepped["w2"], prepped["b2"])

    emb, logit = out
    return emb[:B, :], logit[:B, :C]


# --------------------------------------------------------------------------- params / refs

def init_params(key, in_features=2048, hidden=256, n_classes=2):
    """Deterministic PyTorch-style init (uniform +/- 1/sqrt(fan_in) for Linear)."""
    k1, k2, k3, k4, k5, k6 = jax.random.split(key, 6)
    bound1 = 1.0 / math.sqrt(in_features)
    bound2 = 1.0 / math.sqrt(hidden)
    return {
        "w1": jax.random.uniform(k1, (in_features, hidden), jnp.float32, -bound1, bound1),
        "b1": jax.random.uniform(k2, (1, hidden), jnp.float32, -bound1, bound1),
        "gamma": jnp.ones((1, hidden), jnp.float32),
        "beta": jnp.zeros((1, hidden), jnp.float32),
        # non-trivial running stats so BN actually does something
        "mean": 0.1 * jax.random.normal(k3, (1, hidden), jnp.float32),
        "var": 1.0 + 0.05 * jax.random.uniform(k4, (1, hidden), jnp.float32),
        "w2": jax.random.uniform(k5, (hidden, n_classes), jnp.float32, -bound2, bound2),
        "b2": jax.random.uniform(k6, (1, n_classes), jnp.float32, -bound2, bound2),
    }


def reference_forward_original(x, p, eps=1e-5):
    """Exact eval-mode semantics of the PyTorch module in f32."""
    h = x @ p["w1"] + p["b1"]
    h = (h - p["mean"]) / jnp.sqrt(p["var"] + eps) * p["gamma"] + p["beta"]
    h = jnp.maximum(h, 0.0)
    logit = h @ p["w2"] + p["b2"]
    return h, logit


def reference_forward_prepped(x, prepped):
    """Same math as the kernel (folded BN, bf16 x & w1) for a tight check."""
    C = prepped["n_classes"]
    xb = x.astype(jnp.bfloat16).astype(jnp.float32)
    h = xb @ prepped["w1"].astype(jnp.float32) + prepped["b1"]
    h = jnp.maximum(h, 0.0)
    logit = h @ prepped["w2"] + prepped["b2"]
    return h, logit[:, :C]


# --------------------------------------------------------------------------- main

if __name__ == "__main__":
    key = jax.random.PRNGKey(0)
    kx, kp = jax.random.split(key)

    B, D, H, C = 8, 2048, 256, 2   # in_features=2048 is fixed by the module
    x = jax.random.normal(kx, (B, D), jnp.float32)
    params = init_params(kp, in_features=D, hidden=H, n_classes=C)
    prepped = prepare_params(params)

    emb, logit = res_classifier_forward(x, prepped)
    emb, logit = jax.block_until_ready(emb), jax.block_until_ready(logit)

    # Tight check against a reference using the same folded-BN / bf16 inputs
    # (only accumulation-order differences remain).
    ref_emb_p, ref_logit_p = reference_forward_prepped(x, prepped)
    assert jnp.allclose(emb, ref_emb_p, atol=1e-4, rtol=1e-4)
    assert jnp.allclose(logit, ref_logit_p, atol=1e-4, rtol=1e-4)

    # Looser check against exact f32 module semantics; the difference is the
    # deliberate bf16 quantization of x and w1 (DMA-bandwidth / MXU optimization).
    ref_emb, ref_logit = reference_forward_original(x, params)
    assert jnp.allclose(emb, ref_emb, atol=5e-2, rtol=5e-2)
    assert jnp.allclose(logit, ref_logit, atol=5e-2, rtol=5e-2)

    print("KERNEL_OK")
</pallas_src>

<mosaic_0001>
module attributes {stable_mosaic.version = 11 : i64} {
  func.func @_res_classifier_kernel(%arg0: i32, %arg1: memref<8x2048xbf16, #tpu.memory_space<vmem>>, %arg2: memref<2048x256xbf16, #tpu.memory_space<vmem>>, %arg3: memref<1x256xf32, #tpu.memory_space<vmem>>, %arg4: memref<256x128xf32, #tpu.memory_space<vmem>>, %arg5: memref<1x128xf32, #tpu.memory_space<vmem>>, %arg6: memref<8x256xf32, #tpu.memory_space<vmem>>, %arg7: memref<8x128xf32, #tpu.memory_space<vmem>>) attributes {dimension_semantics = [#tpu.dimension_semantics<parallel>], iteration_bounds = array<i64: 1>, scalar_prefetch = 0 : i64, scratch_operands = 0 : i64, tpu.core_type = #tpu.core_type<tc>, window_params = [{transform_indices = @transform_0, window_bounds = array<i64: 8, 2048>}, {pipeline_mode = #tpu.pipeline_mode<synchronous>, transform_indices = @transform_1, window_bounds = array<i64: 2048, 256>}, {pipeline_mode = #tpu.pipeline_mode<synchronous>, transform_indices = @transform_2, window_bounds = array<i64: 1, 256>}, {pipeline_mode = #tpu.pipeline_mode<synchronous>, transform_indices = @transform_3, window_bounds = array<i64: 256, 128>}, {pipeline_mode = #tpu.pipeline_mode<synchronous>, transform_indices = @transform_4, window_bounds = array<i64: 1, 128>}, {transform_indices = @transform_5, window_bounds = array<i64: 8, 256>}, {transform_indices = @transform_6, window_bounds = array<i64: 8, 128>}]} {
    %c0 = arith.constant 0 : index
    %c0_0 = arith.constant 0 : index
    %0 = vector.load %arg1[%c0, %c0_0] : memref<8x2048xbf16, #tpu.memory_space<vmem>>, vector<8x2048xbf16>
    %c0_1 = arith.constant 0 : index
    %c0_2 = arith.constant 0 : index
    %1 = vector.load %arg2[%c0_1, %c0_2] : memref<2048x256xbf16, #tpu.memory_space<vmem>>, vector<2048x256xbf16>
    %cst = arith.constant dense<0.000000e+00> : vector<8x256xf32>
    %2 = tpu.matmul %0, %1, %cst {dimension_numbers = #tpu.dot_dimension_numbers<[1], [0], [0], [1], [0, 0, 1, 1], [], []>} : vector<8x2048xbf16>, vector<2048x256xbf16>, vector<8x256xf32> -> vector<8x256xf32>
    %c0_3 = arith.constant 0 : index
    %c0_4 = arith.constant 0 : index
    %3 = vector.load %arg3[%c0_3, %c0_4] : memref<1x256xf32, #tpu.memory_space<vmem>>, vector<1x256xf32>
    %4 = vector.broadcast %3 : vector<1x256xf32> to vector<8x256xf32>
    %5 = arith.addf %2, %4 : vector<8x256xf32>
    %cst_5 = arith.constant 0.000000e+00 : f32
    %6 = vector.broadcast %cst_5 : f32 to vector<8x256xf32>
    %7 = arith.maximumf %5, %6 : vector<8x256xf32>
    %c0_6 = arith.constant 0 : index
    %c0_7 = arith.constant 0 : index
    %8 = vector.load %arg6[%c0_6, %c0_7] : memref<8x256xf32, #tpu.memory_space<vmem>>, vector<8x256xf32>
    tpu.vector_store %arg6[%c0_6, %c0_7], %7 {strides = array<i32>} : memref<8x256xf32, #tpu.memory_space<vmem>>, vector<8x256xf32>,
    %c0_8 = arith.constant 0 : index
    %c0_9 = arith.constant 0 : index
    %9 = vector.load %arg4[%c0_8, %c0_9] : memref<256x128xf32, #tpu.memory_space<vmem>>, vector<256x128xf32>
    %cst_10 = arith.constant dense<0.000000e+00> : vector<8x128xf32>
    %10 = tpu.matmul %7, %9, %cst_10 {dimension_numbers = #tpu.dot_dimension_numbers<[1], [0], [0], [1], [0, 0, 1, 1], [], []>} : vector<8x256xf32>, vector<256x128xf32>, vector<8x128xf32> -> vector<8x128xf32>
    %c0_11 = arith.constant 0 : index
    %c0_12 = arith.constant 0 : index
    %11 = vector.load %arg5[%c0_11, %c0_12] : memref<1x128xf32, #tpu.memory_space<vmem>>, vector<1x128xf32>
    %12 = vector.broadcast %11 : vector<1x128xf32> to vector<8x128xf32>
    %13 = arith.addf %10, %12 : vector<8x128xf32>
    %c0_13 = arith.constant 0 : index
    %c0_14 = arith.constant 0 : index
    %14 = vector.load %arg7[%c0_13, %c0_14] : memref<8x128xf32, #tpu.memory_space<vmem>>, vector<8x128xf32>
    tpu.vector_store %arg7[%c0_13, %c0_14], %13 {strides = array<i32>} : memref<8x128xf32, #tpu.memory_space<vmem>>, vector<8x128xf32>,
    return
  }
  func.func @transform_0(%arg0: i32) -> (i32, i32) {
    %c0_i32 = arith.constant 0 : i32
    %c0_i32_0 = arith.constant 0 : i32
    return %arg0, %c0_i32 : i32, i32
  }
  func.func @transform_1(%arg0: i32) -> (i32, i32) {
    %c0_i32 = arith.constant 0 : i32
    %c0_i32_0 = arith.constant 0 : i32
    %c0_i32_1 = arith.constant 0 : i32
    return %c0_i32, %c0_i32_0 : i32, i32
  }
  func.func @transform_2(%arg0: i32) -> (i32, i32) {
    %c0_i32 = arith.constant 0 : i32
    %c0_i32_0 = arith.constant 0 : i32
    %c0_i32_1 = arith.constant 0 : i32
    return %c0_i32, %c0_i32_0 : i32, i32
  }
  func.func @transform_3(%arg0: i32) -> (i32, i32) {
    %c0_i32 = arith.constant 0 : i32
    %c0_i32_0 = arith.constant 0 : i32
    %c0_i32_1 = arith.constant 0 : i32
    return %c0_i32, %c0_i32_0 : i32, i32
  }
  func.func @transform_4(%arg0: i32) -> (i32, i32) {
    %c0_i32 = arith.constant 0 : i32
    %c0_i32_0 = arith.constant 0 : i32
    %c0_i32_1 = arith.constant 0 : i32
    return %c0_i32, %c0_i32_0 : i32, i32
  }
  func.func @transform_5(%arg0: i32) -> (i32, i32) {
    %c0_i32 = arith.constant 0 : i32
    %c0_i32_0 = arith.constant 0 : i32
    return %arg0, %c0_i32 : i32, i32
  }
  func.func @transform_6(%arg0: i32) -> (i32, i32) {
    %c0_i32 = arith.constant 0 : i32
    %c0_i32_0 = arith.constant 0 : i32
    return %arg0, %c0_i32 : i32, i32
  }
}

</mosaic_0001>

<llo_original>
// kernel: tpu_custom_call.1
$region0: #{tpu_custom_call.1}
  #allocation0 [shape = 'u32[]', space=smem, size = 0x4, offset = 0x4, fixed_abs, tag = 'smem constant byte address 0x4 - core index']
  #allocation1 [shape = 'u32[72,128]{1,0:T(1,128)}', space=vmem, size = 0x9000, scoped, tag = 'internal scratch']
  %s0 = inlined_call_operand.hbm [shape: bf16[8,2048], index: 0, kind: input, shape index: {}]
  %s1 = inlined_call_operand.hbm [shape: bf16[2048,256], index: 1, kind: input, shape index: {}]
  %s2 = inlined_call_operand.hbm [shape: f32[1,256], index: 2, kind: input, shape index: {}]
  %s3 = inlined_call_operand.hbm [shape: f32[256,128], index: 3, kind: input, shape index: {}]
  %s4 = inlined_call_operand.vmem [shape: f32[1,128], index: 4, kind: input, shape index: {}]
  %s5 = inlined_call_operand.hbm [shape: f32[8,256], index: 5, kind: output, shape index: {0}]
  %s6 = inlined_call_operand.hbm [shape: f32[8,128], index: 6, kind: output, shape index: {1}]
  %7 = xla_tuple %s5, %s6
  %s8 = sld [smem:[#allocation0]]
  $region54: #{tpu_custom_call.1} parent=0
    _
  %s10 = ssub.s32 1, %s8
  %s11 = scalar_select 0, %s10, %s8
  $region1: #{tpu_custom_call.1} parent=0
    #allocation2 [shape = 'u8[32768]{0}', space=vmem, size = 0x8000, scoped, tag = 'input window, operand 0, single buffered']
    #allocation3 [shape = 's32[1]{0}', space=sflag, size = 0x4, scoped, tag = 'scoped memory for tpu_custom_call.1']
    #allocation4 [shape = 's32[1]{0}', space=sflag, size = 0x4, scoped, tag = 'scoped memory for tpu_custom_call.1']
    #allocation5 [shape = 'u8[1048576]{0}', space=vmem, size = 0x100000, scoped, tag = 'input window, operand 1, single buffered']
    #allocation6 [shape = 's32[1]{0}', space=sflag, size = 0x4, scoped, tag = 'scoped memory for tpu_custom_call.1']
    #allocation7 [shape = 'u8[1024]{0}', space=vmem, size = 0x400, scoped, tag = 'input window, operand 2, single buffered']
    #allocation8 [shape = 'u8[131072]{0}', space=vmem, size = 0x20000, scoped, tag = 'input window, operand 3, single buffered']
    #allocation9 [shape = 's32[1]{0}', space=sflag, size = 0x4, scoped, tag = 'scoped memory for tpu_custom_call.1']
    #allocation10 [shape = 'u8[8192]{0}', space=vmem, size = 0x2000, scoped, tag = 'output window, operand 0, single buffered']
    #allocation11 [shape = 'u8[4096]{0}', space=vmem, size = 0x1000, scoped, tag = 'output window, operand 1, single buffered']
    #allocation12 [shape = 's32[1]{0}', space=sflag, size = 0x4, scoped, tag = 'scoped memory for tpu_custom_call.1']
    %12 = vsyncpa [#allocation3], 0
    %13 = vsyncpa [#allocation6], 0
    %14 = vsyncpa [#allocation9], 0
    %15 = vsyncpa [#allocation4], 0
    %16 = vsyncpa [#allocation12], 0
    // Predicated region
    $region2: #{tpu_custom_call.1} parent=1 // pred_check
      _
    $region3: #{tpu_custom_call.1} parent=1 // pred_check_branch
      %18 = sbr.rel (0) target = $region5
    $region4: #{tpu_custom_call.1} parent=1 // pred_region
      %20 = vsyncadd [#allocation3], 0
      %s22 = sshll.u32 %s0, 4
      %s23 = int_to_ptr.hbm [resolvable:$true] %s22
      %s24 = sshll.u32 [#allocation2], 4
      %s25 = int_to_ptr.vmem [resolvable:$true] %s24
      %27 = dma.hbm_to_vmem [thread:$0]  %s23, 1024, %s25, [#allocation3]
    $region5: #{tpu_custom_call.1} parent=1 // pred_fallthru
      _
    // Predicated region
    $region6: #{tpu_custom_call.1} parent=1 // pred_check
      _
    $region7: #{tpu_custom_call.1} parent=1 // pred_check_branch
      %29 = sbr.rel (0) target = $region9
    $region8: #{tpu_custom_call.1} parent=1 // pred_region
      %31 = vsyncadd [#allocation6], 0
      %s32 = sshll.u32 %s1, 4
      %s33 = int_to_ptr.hbm [resolvable:$true] %s32
      %s34 = sshll.u32 [#allocation5], 4
      %s35 = int_to_ptr.vmem [resolvable:$true] %s34
      %40 = dma.hbm_to_vmem [thread:$0]  %s33, 32768, %s35, [#allocation6], 128, 128, 8
    $region9: #{tpu_custom_call.1} parent=1 // pred_fallthru
      _
    // Predicated region
    $region10: #{tpu_custom_call.1} parent=1 // pred_check
      _
    $region11: #{tpu_custom_call.1} parent=1 // pred_check_branch
      %42 = sbr.rel (0) target = $region13
    $region12: #{tpu_custom_call.1} parent=1 // pred_region
      %44 = vsyncadd [#allocation6], 0
      %s46 = sshll.u32 %s2, 4
      %s47 = int_to_ptr.hbm [resolvable:$true] %s46
      %s48 = sshll.u32 [#allocation7], 4
      %s49 = int_to_ptr.vmem [resolvable:$true] %s48
      %51 = dma.hbm_to_vmem [thread:$0]  %s47, 32, %s49, [#allocation6]
    $region13: #{tpu_custom_call.1} parent=1 // pred_fallthru
      _
    // Predicated region
    $region14: #{tpu_custom_call.1} parent=1 // pred_check
      _
    $region15: #{tpu_custom_call.1} parent=1 // pred_check_branch
      %53 = sbr.rel (0) target = $region17
    $region16: #{tpu_custom_call.1} parent=1 // pred_region
      %55 = vsyncadd [#allocation9], 0
      %s56 = sshll.u32 %s3, 4
      %s57 = int_to_ptr.hbm [resolvable:$true] %s56
      %s58 = sshll.u32 [#allocation8], 4
      %s59 = int_to_ptr.vmem [resolvable:$true] %s58
      %64 = dma.hbm_to_vmem [thread:$0]  %s57, 4096, %s59, [#allocation9], 128, 128, 8
    $region17: #{tpu_custom_call.1} parent=1 // pred_fallthru
      _
    // Predicated region
    $region18: #{tpu_custom_call.1} parent=1 // pred_check
      _
    $region19: #{tpu_custom_call.1} parent=1 // pred_check_branch
      %66 = sbr.rel (0) target = $region21
    $region20: #{tpu_custom_call.1} parent=1 // pred_region
      _
    $region21: #{tpu_custom_call.1} parent=1 // pred_fallthru
      _
    // Predicated region
    $region22: #{tpu_custom_call.1} parent=1 // pred_check
      _
    $region23: #{tpu_custom_call.1} parent=1 // pred_check_branch
      %68 = sbr.rel (0) target = $region25
    $region24: #{tpu_custom_call.1} parent=1 // pred_region
      %70 = dma.done [#allocation3], 1024
    $region25: #{tpu_custom_call.1} parent=1 // pred_fallthru
      _
    // Predicated region
    $region26: #{tpu_custom_call.1} parent=1 // pred_check
      _
    $region27: #{tpu_custom_call.1} parent=1 // pred_check_branch
      %72 = sbr.rel (0) target = $region29
    $region28: #{tpu_custom_call.1} parent=1 // pred_region
      %74 = dma.done [#allocation6], 32768
    $region29: #{tpu_custom_call.1} parent=1 // pred_fallthru
      _
    // Predicated region
    $region30: #{tpu_custom_call.1} parent=1 // pred_check
      _
    $region31: #{tpu_custom_call.1} parent=1 // pred_check_branch
      %76 = sbr.rel (0) target = $region33
    $region32: #{tpu_custom_call.1} parent=1 // pred_region
      %78 = dma.done [#allocation6], 32
    $region33: #{tpu_custom_call.1} parent=1 // pred_fallthru
      _
    // Predicated region
    $region34: #{tpu_custom_call.1} parent=1 // pred_check
      _
    $region35: #{tpu_custom_call.1} parent=1 // pred_check_branch
      %80 = sbr.rel (0) target = $region37
    $region36: #{tpu_custom_call.1} parent=1 // pred_region
      %82 = dma.done [#allocation9], 4096
    $region37: #{tpu_custom_call.1} parent=1 // pred_fallthru
      _
    %v83 = vld [vmem:[#allocation2] sm:$0xff]
    %v84 = vld [vmem:[#allocation2 + $0x8] sm:$0xff]
    %v85 = vld [vmem:[#allocation2 + $0x10] sm:$0xff]
    %v86 = vld [vmem:[#allocation2 + $0x18] sm:$0xff]
    %v87 = vld [vmem:[#allocation2 + $0x20] sm:$0xff]
    %v88 = vld [vmem:[#allocation2 + $0x28] sm:$0xff]
    %v89 = vld [vmem:[#allocation2 + $0x30] sm:$0xff]
    %v90 = vld [vmem:[#allocation2 + $0x38] sm:$0xff]
    %v91 = vld [vmem:[#allocation5] sm:$0xff]
    %v92 = vld [vmem:[#allocation5 + $0x8] sm:$0xff]
    %v93 = vld [vmem:[#allocation5 + $0x10] sm:$0xff]
    %v94 = vld [vmem:[#allocation5 + $0x18] sm:$0xff]
    %v95 = vld [vmem:[#allocation5 + $0x20] sm:$0xff]
    %v96 = vld [vmem:[#allocation5 + $0x28] sm:$0xff]
    %v97 = vld [vmem:[#allocation5 + $0x30] sm:$0xff]
    %v98 = vld [vmem:[#allocation5 + $0x38] sm:$0xff]
    %v99 = vld [vmem:[#allocation5 + $0x40] sm:$0xff]
    %v100 = vld [vmem:[#allocation5 + $0x48] sm:$0xff]
    %v101 = vld [vmem:[#allocation5 + $0x50] sm:$0xff]
    %v102 = vld [vmem:[#allocation5 + $0x58] sm:$0xff]
    %v103 = vld [vmem:[#allocation5 + $0x60] sm:$0xff]
    %v104 = vld [vmem:[#allocation5 + $0x68] sm:$0xff]
    %v105 = vld [vmem:[#allocation5 + $0x70] sm:$0xff]
    %v106 = vld [vmem:[#allocation5 + $0x78] sm:$0xff]
    %v107 = vld [vmem:[#allocation5 + $0x80] sm:$0xff]
    %v108 = vld [vmem:[#allocation5 + $0x88] sm:$0xff]
    %v109 = vld [vmem:[#allocation5 + $0x90] sm:$0xff]
    %v110 = vld [vmem:[#allocation5 + $0x98] sm:$0xff]
    %v111 = vld [vmem:[#allocation5 + $0xa0] sm:$0xff]
    %v112 = vld [vmem:[#allocation5 + $0xa8] sm:$0xff]
    %v113 = vld [vmem:[#allocation5 + $0xb0] sm:$0xff]
    %v114 = vld [vmem:[#allocation5 + $0xb8] sm:$0xff]
    %v115 = vld [vmem:[#allocation5 + $0xc0] sm:$0xff]
    %v116 = vld [vmem:[#allocation5 + $0xc8] sm:$0xff]
    %v117 = vld [vmem:[#allocation5 + $0xd0] sm:$0xff]
    %v118 = vld [vmem:[#allocation5 + $0xd8] sm:$0xff]
    %v119 = vld [vmem:[#allocation5 + $0xe0] sm:$0xff]
    %v120 = vld [vmem:[#allocation5 + $0xe8] sm:$0xff]
    %v121 = vld [vmem:[#allocation5 + $0xf0] sm:$0xff]
    %v122 = vld [vmem:[#allocation5 + $0xf8] sm:$0xff]
    %v123 = vld [vmem:[#allocation5 + $0x100] sm:$0xff]
    %v124 = vld [vmem:[#allocation5 + $0x108] sm:$0xff]
    %v125 = vld [vmem:[#allocation5 + $0x110] sm:$0xff]
    %v126 = vld [vmem:[#allocation5 + $0x118] sm:$0xff]
    %v127 = vld [vmem:[#allocation5 + $0x120] sm:$0xff]
    %v128 = vld [vmem:[#allocation5 + $0x128] sm:$0xff]
    %v129 = vld [vmem:[#allocation5 + $0x130] sm:$0xff]
    %v130 = vld [vmem:[#allocation5 + $0x138] sm:$0xff]
    %v131 = vld [vmem:[#allocation5 + $0x140] sm:$0xff]
    %v132 = vld [vmem:[#allocation5 + $0x148] sm:$0xff]
    %v133 = vld [vmem:[#allocation5 + $0x150] sm:$0xff]
    %v134 = vld [vmem:[#allocation5 + $0x158] sm:$0xff]
    %v135 = vld [vmem:[#allocation5 + $0x160] sm:$0xff]
    %v136 = vld [vmem:[#allocation5 + $0x168] sm:$0xff]
    %v137 = vld [vmem:[#allocation5 + $0x170] sm:$0xff]
    %v138 = vld [vmem:[#allocation5 + $0x178] sm:$0xff]
    %v139 = vld [vmem:[#allocation5 + $0x180] sm:$0xff]
    %v140 = vld [vmem:[#allocation5 + $0x188] sm:$0xff]
    %v141 = vld [vmem:[#allocation5 + $0x190] sm:$0xff]
    %v142 = vld [vmem:[#allocation5 + $0x198] sm:$0xff]
    %v143 = vld [vmem:[#allocation5 + $0x1a0] sm:$0xff]
    %v144 = vld [vmem:[#allocation5 + $0x1a8] sm:$0xff]
    %v145 = vld [vmem:[#allocation5 + $0x1b0] sm:$0xff]
    %v146 = vld [vmem:[#allocation5 + $0x1b8] sm:$0xff]
    %v147 = vld [vmem:[#allocation5 + $0x1c0] sm:$0xff]
    %v148 = vld [vmem:[#allocation5 + $0x1c8] sm:$0xff]
    %v149 = vld [vmem:[#allocation5 + $0x1d0] sm:$0xff]
    %v150 = vld [vmem:[#allocation5 + $0x1d8] sm:$0xff]
    %v151 = vld [vmem:[#allocation5 + $0x1e0] sm:$0xff]
    %v152 = vld [vmem:[#allocation5 + $0x1e8] sm:$0xff]
    %v153 = vld [vmem:[#allocation5 + $0x1f0] sm:$0xff]
    %v154 = vld [vmem:[#allocation5 + $0x1f8] sm:$0xff]
    %v155 = vld [vmem:[#allocation5 + $0x200] sm:$0xff]
    %v156 = vld [vmem:[#allocation5 + $0x208] sm:$0xff]
    %v157 = vld [vmem:[#allocation5 + $0x210] sm:$0xff]
    %v158 = vld [vmem:[#allocation5 + $0x218] sm:$0xff]
    %v159 = vld [vmem:[#allocation5 + $0x220] sm:$0xff]
    %v160 = vld [vmem:[#allocation5 + $0x228] sm:$0xff]
    %v161 = vld [vmem:[#allocation5 + $0x230] sm:$0xff]
    %v162 = vld [vmem:[#allocation5 + $0x238] sm:$0xff]
    %v163 = vld [vmem:[#allocation5 + $0x240] sm:$0xff]
    %v164 = vld [vmem:[#allocation5 + $0x248] sm:$0xff]
    %v165 = vld [vmem:[#allocation5 + $0x250] sm:$0xff]
    %v166 = vld [vmem:[#allocation5 + $0x258] sm:$0xff]
    %v167 = vld [vmem:[#allocation5 + $0x260] sm:$0xff]
    %v168 = vld [vmem:[#allocation5 + $0x268] sm:$0xff]
    %v169 = vld [vmem:[#allocation5 + $0x270] sm:$0xff]
    %v170 = vld [vmem:[#allocation5 + $0x278] sm:$0xff]
    %v171 = vld [vmem:[#allocation5 + $0x280] sm:$0xff]
    %v172 = vld [vmem:[#allocation5 + $0x288] sm:$0xff]
    %v173 = vld [vmem:[#allocation5 + $0x290] sm:$0xff]
    %v174 = vld [vmem:[#allocation5 + $0x298] sm:$0xff]
    %v175 = vld [vmem:[#allocation5 + $0x2a0] sm:$0xff]
    %v176 = vld [vmem:[#allocation5 + $0x2a8] sm:$0xff]
    %v177 = vld [vmem:[#allocation5 + $0x2b0] sm:$0xff]
    %v178 = vld [vmem:[#allocation5 + $0x2b8] sm:$0xff]
    %v179 = vld [vmem:[#allocation5 + $0x2c0] sm:$0xff]
    %v180 = vld [vmem:[#allocation5 + $0x2c8] sm:$0xff]
    %v181 = vld [vmem:[#allocation5 + $0x2d0] sm:$0xff]
    %v182 = vld [vmem:[#allocation5 + $0x2d8] sm:$0xff]
    %v183 = vld [vmem:[#allocation5 + $0x2e0] sm:$0xff]
    %v184 = vld [vmem:[#allocation5 + $0x2e8] sm:$0xff]
    %v185 = vld [vmem:[#allocation5 + $0x2f0] sm:$0xff]
    %v186 = vld [vmem:[#allocation5 + $0x2f8] sm:$0xff]
    %v187 = vld [vmem:[#allocation5 + $0x300] sm:$0xff]
    %v188 = vld [vmem:[#allocation5 + $0x308] sm:$0xff]
    %v189 = vld [vmem:[#allocation5 + $0x310] sm:$0xff]
    %v190 = vld [vmem:[#allocation5 + $0x318] sm:$0xff]
    %v191 = vld [vmem:[#allocation5 + $0x320] sm:$0xff]
    %v192 = vld [vmem:[#allocation5 + $0x328] sm:$0xff]
    %v193 = vld [vmem:[#allocation5 + $0x330] sm:$0xff]
    %v194 = vld [vmem:[#allocation5 + $0x338] sm:$0xff]
    %v195 = vld [vmem:[#allocation5 + $0x340] sm:$0xff]
    %v196 = vld [vmem:[#allocation5 + $0x348] sm:$0xff]
    %v197 = vld [vmem:[#allocation5 + $0x350] sm:$0xff]
    %v198 = vld [vmem:[#allocation5 + $0x358] sm:$0xff]
    %v199 = vld [vmem:[#allocation5 + $0x360] sm:$0xff]
    %v200 = vld [vmem:[#allocation5 + $0x368] sm:$0xff]
    %v201 = vld [vmem:[#allocation5 + $0x370] sm:$0xff]
    %v202 = vld [vmem:[#allocation5 + $0x378] sm:$0xff]
    %v203 = vld [vmem:[#allocation5 + $0x380] sm:$0xff]
    %v204 = vld [vmem:[#allocation5 + $0x388] sm:$0xff]
    %v205 = vld [vmem:[#allocation5 + $0x390] sm:$0xff]
    %v206 = vld [vmem:[#allocation5 + $0x398] sm:$0xff]
    %v207 = vld [vmem:[#allocation5 + $0x3a0] sm:$0xff]
    %v208 = vld [vmem:[#allocation5 + $0x3a8] sm:$0xff]
    %v209 = vld [vmem:[#allocation5 + $0x3b0] sm:$0xff]
    %v210 = vld [vmem:[#allocation5 + $0x3b8] sm:$0xff]
    %v211 = vld [vmem:[#allocation5 + $0x3c0] sm:$0xff]
    %v212 = vld [vmem:[#allocation5 + $0x3c8] sm:$0xff]
    %v213 = vld [vmem:[#allocation5 + $0x3d0] sm:$0xff]
    %v214 = vld [vmem:[#allocation5 + $0x3d8] sm:$0xff]
    %v215 = vld [vmem:[#allocation5 + $0x3e0] sm:$0xff]
    %v216 = vld [vmem:[#allocation5 + $0x3e8] sm:$0xff]
    %v217 = vld [vmem:[#allocation5 + $0x3f0] sm:$0xff]
    %v218 = vld [vmem:[#allocation5 + $0x3f8] sm:$0xff]
    %v219 = vld [vmem:[#allocation5 + $0x400] sm:$0xff]
    %v220 = vld [vmem:[#allocation5 + $0x408] sm:$0xff]
    %v221 = vld [vmem:[#allocation5 + $0x410] sm:$0xff]
    %v222 = vld [vmem:[#allocation5 + $0x418] sm:$0xff]
    %v223 = vld [vmem:[#allocation5 + $0x420] sm:$0xff]
    %v224 = vld [vmem:[#allocation5 + $0x428] sm:$0xff]
    %v225 = vld [vmem:[#allocation5 + $0x430] sm:$0xff]
    %v226 = vld [vmem:[#allocation5 + $0x438] sm:$0xff]
    %v227 = vld [vmem:[#allocation5 + $0x440] sm:$0xff]
    %v228 = vld [vmem:[#allocation5 + $0x448] sm:$0xff]
    %v229 = vld [vmem:[#allocation5 + $0x450] sm:$0xff]
    %v230 = vld [vmem:[#allocation5 + $0x458] sm:$0xff]
    %v231 = vld [vmem:[#allocation5 + $0x460] sm:$0xff]
    %v232 = vld [vmem:[#allocation5 + $0x468] sm:$0xff]
    %v233 = vld [vmem:[#allocation5 + $0x470] sm:$0xff]
    %v234 = vld [vmem:[#allocation5 + $0x478] sm:$0xff]
    %v235 = vld [vmem:[#allocation5 + $0x480] sm:$0xff]
    %v236 = vld [vmem:[#allocation5 + $0x488] sm:$0xff]
    %v237 = vld [vmem:[#allocation5 + $0x490] sm:$0xff]
    %v238 = vld [vmem:[#allocation5 + $0x498] sm:$0xff]
    %v239 = vld [vmem:[#allocation5 + $0x4a0] sm:$0xff]
    %v240 = vld [vmem:[#allocation5 + $0x4a8] sm:$0xff]
    %v241 = vld [vmem:[#allocation5 + $0x4b0] sm:$0xff]
    %v242 = vld [vmem:[#allocation5 + $0x4b8] sm:$0xff]
    %v243 = vld [vmem:[#allocation5 + $0x4c0] sm:$0xff]
    %v244 = vld [vmem:[#allocation5 + $0x4c8] sm:$0xff]
    %v245 = vld [vmem:[#allocation5 + $0x4d0] sm:$0xff]
    %v246 = vld [vmem:[#allocation5 + $0x4d8] sm:$0xff]
    %v247 = vld [vmem:[#allocation5 + $0x4e0] sm:$0xff]
    %v248 = vld [vmem:[#allocation5 + $0x4e8] sm:$0xff]
    %v249 = vld [vmem:[#allocation5 + $0x4f0] sm:$0xff]
    %v250 = vld [vmem:[#allocation5 + $0x4f8] sm:$0xff]
    %v251 = vld [vmem:[#allocation5 + $0x500] sm:$0xff]
    %v252 = vld [vmem:[#allocation5 + $0x508] sm:$0xff]
    %v253 = vld [vmem:[#allocation5 + $0x510] sm:$0xff]
    %v254 = vld [vmem:[#allocation5 + $0x518] sm:$0xff]
    %v255 = vld [vmem:[#allocation5 + $0x520] sm:$0xff]
    %v256 = vld [vmem:[#allocation5 + $0x528] sm:$0xff]
    %v257 = vld [vmem:[#allocation5 + $0x530] sm:$0xff]
    %v258 = vld [vmem:[#allocation5 + $0x538] sm:$0xff]
    %v259 = vld [vmem:[#allocation5 + $0x540] sm:$0xff]
    %v260 = vld [vmem:[#allocation5 + $0x548] sm:$0xff]
    %v261 = vld [vmem:[#allocation5 + $0x550] sm:$0xff]
    %v262 = vld [vmem:[#allocation5 + $0x558] sm:$0xff]
    %v263 = vld [vmem:[#allocation5 + $0x560] sm:$0xff]
    %v264 = vld [vmem:[#allocation5 + $0x568] sm:$0xff]
    %v265 = vld [vmem:[#allocation5 + $0x570] sm:$0xff]
    %v266 = vld [vmem:[#allocation5 + $0x578] sm:$0xff]
    %v267 = vld [vmem:[#allocation5 + $0x580] sm:$0xff]
    %v268 = vld [vmem:[#allocation5 + $0x588] sm:$0xff]
    %v269 = vld [vmem:[#allocation5 + $0x590] sm:$0xff]
    %v270 = vld [vmem:[#allocation5 + $0x598] sm:$0xff]
    %v271 = vld [vmem:[#allocation5 + $0x5a0] sm:$0xff]
    %v272 = vld [vmem:[#allocation5 + $0x5a8] sm:$0xff]
    %v273 = vld [vmem:[#allocation5 + $0x5b0] sm:$0xff]
    %v274 = vld [vmem:[#allocation5 + $0x5b8] sm:$0xff]
    %v275 = vld [vmem:[#allocation5 + $0x5c0] sm:$0xff]
    %v276 = vld [vmem:[#allocation5 + $0x5c8] sm:$0xff]
    %v277 = vld [vmem:[#allocation5 + $0x5d0] sm:$0xff]
    %v278 = vld [vmem:[#allocation5 + $0x5d8] sm:$0xff]
    %v279 = vld [vmem:[#allocation5 + $0x5e0] sm:$0xff]
    %v280 = vld [vmem:[#allocation5 + $0x5e8] sm:$0xff]
    %v281 = vld [vmem:[#allocation5 + $0x5f0] sm:$0xff]
    %v282 = vld [vmem:[#allocation5 + $0x5f8] sm:$0xff]
    %v283 = vld [vmem:[#allocation5 + $0x600] sm:$0xff]
    %v284 = vld [vmem:[#allocation5 + $0x608] sm:$0xff]
    %v285 = vld [vmem:[#allocation5 + $0x610] sm:$0xff]
    %v286 = vld [vmem:[#allocation5 + $0x618] sm:$0xff]
    %v287 = vld [vmem:[#allocation5 + $0x620] sm:$0xff]
    %v288 = vld [vmem:[#allocation5 + $0x628] sm:$0xff]
    %v289 = vld [vmem:[#allocation5 + $0x630] sm:$0xff]
    %v290 = vld [vmem:[#allocation5 + $0x638] sm:$0xff]
    %v291 = vld [vmem:[#allocation5 + $0x640] sm:$0xff]
    %v292 = vld [vmem:[#allocation5 + $0x648] sm:$0xff]
    %v293 = vld [vmem:[#allocation5 + $0x650] sm:$0xff]
    %v294 = vld [vmem:[#allocation5 + $0x658] sm:$0xff]
    %v295 = vld [vmem:[#allocation5 + $0x660] sm:$0xff]
    %v296 = vld [vmem:[#allocation5 + $0x668] sm:$0xff]
    %v297 = vld [vmem:[#allocation5 + $0x670] sm:$0xff]
    %v298 = vld [vmem:[#allocation5 + $0x678] sm:$0xff]
    %v299 = vld [vmem:[#allocation5 + $0x680] sm:$0xff]
    %v300 = vld [vmem:[#allocation5 + $0x688] sm:$0xff]
    %v301 = vld [vmem:[#allocation5 + $0x690] sm:$0xff]
    %v302 = vld [vmem:[#allocation5 + $0x698] sm:$0xff]
    %v303 = vld [vmem:[#allocation5 + $0x6a0] sm:$0xff]
    %v304 = vld [vmem:[#allocation5 + $0x6a8] sm:$0xff]
    %v305 = vld [vmem:[#allocation5 + $0x6b0] sm:$0xff]
    %v306 = vld [vmem:[#allocation5 + $0x6b8] sm:$0xff]
    %v307 = vld [vmem:[#allocation5 + $0x6c0] sm:$0xff]
    %v308 = vld [vmem:[#allocation5 + $0x6c8] sm:$0xff]
    %v309 = vld [vmem:[#allocation5 + $0x6d0] sm:$0xff]
    %v310 = vld [vmem:[#allocation5 + $0x6d8] sm:$0xff]
    %v311 = vld [vmem:[#allocation5 + $0x6e0] sm:$0xff]
    %v312 = vld [vmem:[#allocation5 + $0x6e8] sm:$0xff]
    %v313 = vld [vmem:[#allocation5 + $0x6f0] sm:$0xff]
    %v314 = vld [vmem:[#allocation5 + $0x6f8] sm:$0xff]
    %v315 = vld [vmem:[#allocation5 + $0x700] sm:$0xff]
    %v316 = vld [vmem:[#allocation5 + $0x708] sm:$0xff]
    %v317 = vld [vmem:[#allocation5 + $0x710] sm:$0xff]
    %v318 = vld [vmem:[#allocation5 + $0x718] sm:$0xff]
    %v319 = vld [vmem:[#allocation5 + $0x720] sm:$0xff]
    %v320 = vld [vmem:[#allocation5 + $0x728] sm:$0xff]
    %v321 = vld [vmem:[#allocation5 + $0x730] sm:$0xff]
    %v322 = vld [vmem:[#allocation5 + $0x738] sm:$0xff]
    %v323 = vld [vmem:[#allocation5 + $0x740] sm:$0xff]
    %v324 = vld [vmem:[#allocation5 + $0x748] sm:$0xff]
    %v325 = vld [vmem:[#allocation5 + $0x750] sm:$0xff]
    %v326 = vld [vmem:[#allocation5 + $0x758] sm:$0xff]
    %v327 = vld [vmem:[#allocation5 + $0x760] sm:$0xff]
    %v328 = vld [vmem:[#allocation5 + $0x768] sm:$0xff]
    %v329 = vld [vmem:[#allocation5 + $0x770] sm:$0xff]
    %v330 = vld [vmem:[#allocation5 + $0x778] sm:$0xff]
    %v331 = vld [vmem:[#allocation5 + $0x780] sm:$0xff]
    %v332 = vld [vmem:[#allocation5 + $0x788] sm:$0xff]
    %v333 = vld [vmem:[#allocation5 + $0x790] sm:$0xff]
    %v334 = vld [vmem:[#allocation5 + $0x798] sm:$0xff]
    %v335 = vld [vmem:[#allocation5 + $0x7a0] sm:$0xff]
    %v336 = vld [vmem:[#allocation5 + $0x7a8] sm:$0xff]
    %v337 = vld [vmem:[#allocation5 + $0x7b0] sm:$0xff]
    %v338 = vld [vmem:[#allocation5 + $0x7b8] sm:$0xff]
    %v339 = vld [vmem:[#allocation5 + $0x7c0] sm:$0xff]
    %v340 = vld [vmem:[#allocation5 + $0x7c8] sm:$0xff]
    %v341 = vld [vmem:[#allocation5 + $0x7d0] sm:$0xff]
    %v342 = vld [vmem:[#allocation5 + $0x7d8] sm:$0xff]
    %v343 = vld [vmem:[#allocation5 + $0x7e0] sm:$0xff]
    %v344 = vld [vmem:[#allocation5 + $0x7e8] sm:$0xff]
    %v345 = vld [vmem:[#allocation5 + $0x7f0] sm:$0xff]
    %v346 = vld [vmem:[#allocation5 + $0x7f8] sm:$0xff]
    %v347 = vld [vmem:[#allocation7] sm:$0x3]
    %v349 = vperm.slane %v347, 0
    %v350 = vperm.slane %v347, 1
    %v361 = vunpack.c.l.b16 %v83
    %v362 = vunpack.c.h.b16 %v83
    %v363 = vunpack.c.l.b16 %v84
    %v364 = vunpack.c.h.b16 %v84
    %v365 = vunpack.c.l.b16 %v85
    %v366 = vunpack.c.h.b16 %v85
    %v367 = vunpack.c.l.b16 %v86
    %v368 = vunpack.c.h.b16 %v86
    %v369 = vunpack.c.l.b16 %v87
    %v370 = vunpack.c.h.b16 %v87
    %v371 = vunpack.c.l.b16 %v88
    %v372 = vunpack.c.h.b16 %v88
    %v373 = vunpack.c.l.b16 %v89
    %v374 = vunpack.c.h.b16 %v89
    %v375 = vunpack.c.l.b16 %v90
    %v376 = vunpack.c.h.b16 %v90
    %v377 = vpack.c.b16 %v361, %v361
    %v378 = vpack.c.b16 %v362, %v362
    %v379 = vpack.c.b16 %v363, %v363
    %v380 = vpack.c.b16 %v364, %v364
    %v381 = vpack.c.b16 %v365, %v365
    %v382 = vpack.c.b16 %v366, %v366
    %v383 = vpack.c.b16 %v367, %v367
    %v384 = vpack.c.b16 %v368, %v368
    %v385 = vpack.c.b16 %v369, %v369
    %v386 = vpack.c.b16 %v370, %v370
    %v387 = vpack.c.b16 %v371, %v371
    %v388 = vpack.c.b16 %v372, %v372
    %v389 = vpack.c.b16 %v373, %v373
    %v390 = vpack.c.b16 %v374, %v374
    %v391 = vpack.c.b16 %v375, %v375
    %v392 = vpack.c.b16 %v376, %v376
    %v665 = vunpack.c.l.b16 %v91
    %v666 = vunpack.c.h.b16 %v91
    %v667 = vunpack.c.l.b16 %v92
    %v668 = vunpack.c.h.b16 %v92
    %v669 = vunpack.c.l.b16 %v93
    %v670 = vunpack.c.h.b16 %v93
    %v671 = vunpack.c.l.b16 %v94
    %v672 = vunpack.c.h.b16 %v94
    %v673 = vunpack.c.l.b16 %v95
    %v674 = vunpack.c.h.b16 %v95
    %v675 = vunpack.c.l.b16 %v96
    %v676 = vunpack.c.h.b16 %v96
    %v677 = vunpack.c.l.b16 %v97
    %v678 = vunpack.c.h.b16 %v97
    %v679 = vunpack.c.l.b16 %v98
    %v680 = vunpack.c.h.b16 %v98
    %v681 = vunpack.c.l.b16 %v99
    %v682 = vunpack.c.h.b16 %v99
    %v683 = vunpack.c.l.b16 %v100
    %v684 = vunpack.c.h.b16 %v100
    %v685 = vunpack.c.l.b16 %v101
    %v686 = vunpack.c.h.b16 %v101
    %v687 = vunpack.c.l.b16 %v102
    %v688 = vunpack.c.h.b16 %v102
    %v689 = vunpack.c.l.b16 %v103
    %v690 = vunpack.c.h.b16 %v103
    %v691 = vunpack.c.l.b16 %v104
    %v692 = vunpack.c.h.b16 %v104
    %v693 = vunpack.c.l.b16 %v105
    %v694 = vunpack.c.h.b16 %v105
    %v695 = vunpack.c.l.b16 %v106
    %v696 = vunpack.c.h.b16 %v106
    %v697 = vunpack.c.l.b16 %v107
    %v698 = vunpack.c.h.b16 %v107
    %v699 = vunpack.c.l.b16 %v108
    %v700 = vunpack.c.h.b16 %v108
    %v701 = vunpack.c.l.b16 %v109
    %v702 = vunpack.c.h.b16 %v109
    %v703 = vunpack.c.l.b16 %v110
    %v704 = vunpack.c.h.b16 %v110
    %v705 = vunpack.c.l.b16 %v111
    %v706 = vunpack.c.h.b16 %v111
    %v707 = vunpack.c.l.b16 %v112
    %v708 = vunpack.c.h.b16 %v112
    %v709 = vunpack.c.l.b16 %v113
    %v710 = vunpack.c.h.b16 %v113
    %v711 = vunpack.c.l.b16 %v114
    %v712 = vunpack.c.h.b16 %v114
    %v713 = vunpack.c.l.b16 %v115
    %v714 = vunpack.c.h.b16 %v115
    %v715 = vunpack.c.l.b16 %v116
    %v716 = vunpack.c.h.b16 %v116
    %v717 = vunpack.c.l.b16 %v117
    %v718 = vunpack.c.h.b16 %v117
    %v719 = vunpack.c.l.b16 %v118
    %v720 = vunpack.c.h.b16 %v118
    %v721 = vunpack.c.l.b16 %v119
    %v722 = vunpack.c.h.b16 %v119
    %v723 = vunpack.c.l.b16 %v120
    %v724 = vunpack.c.h.b16 %v120
    %v725 = vunpack.c.l.b16 %v121
    %v726 = vunpack.c.h.b16 %v121
    %v727 = vunpack.c.l.b16 %v122
    %v728 = vunpack.c.h.b16 %v122
    %v729 = vunpack.c.l.b16 %v123
    %v730 = vunpack.c.h.b16 %v123
    %v731 = vunpack.c.l.b16 %v124
    %v732 = vunpack.c.h.b16 %v124
    %v733 = vunpack.c.l.b16 %v125
    %v734 = vunpack.c.h.b16 %v125
    %v735 = vunpack.c.l.b16 %v126
    %v736 = vunpack.c.h.b16 %v126
    %v737 = vunpack.c.l.b16 %v127
    %v738 = vunpack.c.h.b16 %v127
    %v739 = vunpack.c.l.b16 %v128
    %v740 = vunpack.c.h.b16 %v128
    %v741 = vunpack.c.l.b16 %v129
    %v742 = vunpack.c.h.b16 %v129
    %v743 = vunpack.c.l.b16 %v130
    %v744 = vunpack.c.h.b16 %v130
    %v745 = vunpack.c.l.b16 %v131
    %v746 = vunpack.c.h.b16 %v131
    %v747 = vunpack.c.l.b16 %v132
    %v748 = vunpack.c.h.b16 %v132
    %v749 = vunpack.c.l.b16 %v133
    %v750 = vunpack.c.h.b16 %v133
    %v751 = vunpack.c.l.b16 %v134
    %v752 = vunpack.c.h.b16 %v134
    %v753 = vunpack.c.l.b16 %v135
    %v754 = vunpack.c.h.b16 %v135
    %v755 = vunpack.c.l.b16 %v136
    %v756 = vunpack.c.h.b16 %v136
    %v757 = vunpack.c.l.b16 %v137
    %v758 = vunpack.c.h.b16 %v137
    %v759 = vunpack.c.l.b16 %v138
    %v760 = vunpack.c.h.b16 %v138
    %v761 = vunpack.c.l.b16 %v139
    %v762 = vunpack.c.h.b16 %v139
    %v763 = vunpack.c.l.b16 %v140
    %v764 = vunpack.c.h.b16 %v140
    %v765 = vunpack.c.l.b16 %v141
    %v766 = vunpack.c.h.b16 %v141
    %v767 = vunpack.c.l.b16 %v142
    %v768 = vunpack.c.h.b16 %v142
    %v769 = vunpack.c.l.b16 %v143
    %v770 = vunpack.c.h.b16 %v143
    %v771 = vunpack.c.l.b16 %v144
    %v772 = vunpack.c.h.b16 %v144
    %v773 = vunpack.c.l.b16 %v145
    %v774 = vunpack.c.h.b16 %v145
    %v775 = vunpack.c.l.b16 %v146
    %v776 = vunpack.c.h.b16 %v146
    %v777 = vunpack.c.l.b16 %v147
    %v778 = vunpack.c.h.b16 %v147
    %v779 = vunpack.c.l.b16 %v148
    %v780 = vunpack.c.h.b16 %v148
    %v781 = vunpack.c.l.b16 %v149
    %v782 = vunpack.c.h.b16 %v149
    %v783 = vunpack.c.l.b16 %v150
    %v784 = vunpack.c.h.b16 %v150
    %v785 = vunpack.c.l.b16 %v151
    %v786 = vunpack.c.h.b16 %v151
    %v787 = vunpack.c.l.b16 %v152
    %v788 = vunpack.c.h.b16 %v152
    %v789 = vunpack.c.l.b16 %v153
    %v790 = vunpack.c.h.b16 %v153
    %v791 = vunpack.c.l.b16 %v154
    %v792 = vunpack.c.h.b16 %v154
    %v793 = vunpack.c.l.b16 %v155
    %v794 = vunpack.c.h.b16 %v155
    %v795 = vunpack.c.l.b16 %v156
    %v796 = vunpack.c.h.b16 %v156
    %v797 = vunpack.c.l.b16 %v157
    %v798 = vunpack.c.h.b16 %v157
    %v799 = vunpack.c.l.b16 %v158
    %v800 = vunpack.c.h.b16 %v158
    %v801 = vunpack.c.l.b16 %v159
    %v802 = vunpack.c.h.b16 %v159
    %v803 = vunpack.c.l.b16 %v160
    %v804 = vunpack.c.h.b16 %v160
    %v805 = vunpack.c.l.b16 %v161
    %v806 = vunpack.c.h.b16 %v161
    %v807 = vunpack.c.l.b16 %v162
    %v808 = vunpack.c.h.b16 %v162
    %v809 = vunpack.c.l.b16 %v163
    %v810 = vunpack.c.h.b16 %v163
    %v811 = vunpack.c.l.b16 %v164
    %v812 = vunpack.c.h.b16 %v164
    %v813 = vunpack.c.l.b16 %v165
    %v814 = vunpack.c.h.b16 %v165
    %v815 = vunpack.c.l.b16 %v166
    %v816 = vunpack.c.h.b16 %v166
    %v817 = vunpack.c.l.b16 %v167
    %v818 = vunpack.c.h.b16 %v167
    %v819 = vunpack.c.l.b16 %v168
    %v820 = vunpack.c.h.b16 %v168
    %v821 = vunpack.c.l.b16 %v169
    %v822 = vunpack.c.h.b16 %v169
    %v823 = vunpack.c.l.b16 %v170
    %v824 = vunpack.c.h.b16 %v170
    %v825 = vunpack.c.l.b16 %v171
    %v826 = vunpack.c.h.b16 %v171
    %v827 = vunpack.c.l.b16 %v172
    %v828 = vunpack.c.h.b16 %v172
    %v829 = vunpack.c.l.b16 %v173
    %v830 = vunpack.c.h.b16 %v173
    %v831 = vunpack.c.l.b16 %v174
    %v832 = vunpack.c.h.b16 %v174
    %v833 = vunpack.c.l.b16 %v175
    %v834 = vunpack.c.h.b16 %v175
    %v835 = vunpack.c.l.b16 %v176
    %v836 = vunpack.c.h.b16 %v176
    %v837 = vunpack.c.l.b16 %v177
    %v838 = vunpack.c.h.b16 %v177
    %v839 = vunpack.c.l.b16 %v178
    %v840 = vunpack.c.h.b16 %v178
    %v841 = vunpack.c.l.b16 %v179
    %v842 = vunpack.c.h.b16 %v179
    %v843 = vunpack.c.l.b16 %v180
    %v844 = vunpack.c.h.b16 %v180
    %v845 = vunpack.c.l.b16 %v181
    %v846 = vunpack.c.h.b16 %v181
    %v847 = vunpack.c.l.b16 %v182
    %v848 = vunpack.c.h.b16 %v182
    %v849 = vunpack.c.l.b16 %v183
    %v850 = vunpack.c.h.b16 %v183
    %v851 = vunpack.c.l.b16 %v184
    %v852 = vunpack.c.h.b16 %v184
    %v853 = vunpack.c.l.b16 %v185
    %v854 = vunpack.c.h.b16 %v185
    %v855 = vunpack.c.l.b16 %v186
    %v856 = vunpack.c.h.b16 %v186
    %v857 = vunpack.c.l.b16 %v187
    %v858 = vunpack.c.h.b16 %v187
    %v859 = vunpack.c.l.b16 %v188
    %v860 = vunpack.c.h.b16 %v188
    %v861 = vunpack.c.l.b16 %v189
    %v862 = vunpack.c.h.b16 %v189
    %v863 = vunpack.c.l.b16 %v190
    %v864 = vunpack.c.h.b16 %v190
    %v865 = vunpack.c.l.b16 %v191
    %v866 = vunpack.c.h.b16 %v191
    %v867 = vunpack.c.l.b16 %v192
    %v868 = vunpack.c.h.b16 %v192
    %v869 = vunpack.c.l.b16 %v193
    %v870 = vunpack.c.h.b16 %v193
    %v871 = vunpack.c.l.b16 %v194
    %v872 = vunpack.c.h.b16 %v194
    %v873 = vunpack.c.l.b16 %v195
    %v874 = vunpack.c.h.b16 %v195
    %v875 = vunpack.c.l.b16 %v196
    %v876 = vunpack.c.h.b16 %v196
    %v877 = vunpack.c.l.b16 %v197
    %v878 = vunpack.c.h.b16 %v197
    %v879 = vunpack.c.l.b16 %v198
    %v880 = vunpack.c.h.b16 %v198
    %v881 = vunpack.c.l.b16 %v199
    %v882 = vunpack.c.h.b16 %v199
    %v883 = vunpack.c.l.b16 %v200
    %v884 = vunpack.c.h.b16 %v200
    %v885 = vunpack.c.l.b16 %v201
    %v886 = vunpack.c.h.b16 %v201
    %v887 = vunpack.c.l.b16 %v202
    %v888 = vunpack.c.h.b16 %v202
    %v889 = vunpack.c.l.b16 %v203
    %v890 = vunpack.c.h.b16 %v203
    %v891 = vunpack.c.l.b16 %v204
    %v892 = vunpack.c.h.b16 %v204
    %v893 = vunpack.c.l.b16 %v205
    %v894 = vunpack.c.h.b16 %v205
    %v895 = vunpack.c.l.b16 %v206
    %v896 = vunpack.c.h.b16 %v206
    %v897 = vunpack.c.l.b16 %v207
    %v898 = vunpack.c.h.b16 %v207
    %v899 = vunpack.c.l.b16 %v208
    %v900 = vunpack.c.h.b16 %v208
    %v901 = vunpack.c.l.b16 %v209
    %v902 = vunpack.c.h.b16 %v209
    %v903 = vunpack.c.l.b16 %v210
    %v904 = vunpack.c.h.b16 %v210
    %v905 = vunpack.c.l.b16 %v211
    %v906 = vunpack.c.h.b16 %v211
    %v907 = vunpack.c.l.b16 %v212
    %v908 = vunpack.c.h.b16 %v212
    %v909 = vunpack.c.l.b16 %v213
    %v910 = vunpack.c.h.b16 %v213
    %v911 = vunpack.c.l.b16 %v214
    %v912 = vunpack.c.h.b16 %v214
    %v913 = vunpack.c.l.b16 %v215
    %v914 = vunpack.c.h.b16 %v215
    %v915 = vunpack.c.l.b16 %v216
    %v916 = vunpack.c.h.b16 %v216
    %v917 = vunpack.c.l.b16 %v217
    %v918 = vunpack.c.h.b16 %v217
    %v919 = vunpack.c.l.b16 %v218
    %v920 = vunpack.c.h.b16 %v218
    %v921 = vunpack.c.l.b16 %v219
    %v922 = vunpack.c.h.b16 %v219
    %v923 = vunpack.c.l.b16 %v220
    %v924 = vunpack.c.h.b16 %v220
    %v925 = vunpack.c.l.b16 %v221
    %v926 = vunpack.c.h.b16 %v221
    %v927 = vunpack.c.l.b16 %v222
    %v928 = vunpack.c.h.b16 %v222
    %v929 = vunpack.c.l.b16 %v223
    %v930 = vunpack.c.h.b16 %v223
    %v931 = vunpack.c.l.b16 %v224
    %v932 = vunpack.c.h.b16 %v224
    %v933 = vunpack.c.l.b16 %v225
    %v934 = vunpack.c.h.b16 %v225
    %v935 = vunpack.c.l.b16 %v226
    %v936 = vunpack.c.h.b16 %v226
    %v937 = vunpack.c.l.b16 %v227
    %v938 = vunpack.c.h.b16 %v227
    %v939 = vunpack.c.l.b16 %v228
    %v940 = vunpack.c.h.b16 %v228
    %v941 = vunpack.c.l.b16 %v229
    %v942 = vunpack.c.h.b16 %v229
    %v943 = vunpack.c.l.b16 %v230
    %v944 = vunpack.c.h.b16 %v230
    %v945 = vunpack.c.l.b16 %v231
    %v946 = vunpack.c.h.b16 %v231
    %v947 = vunpack.c.l.b16 %v232
    %v948 = vunpack.c.h.b16 %v232
    %v949 = vunpack.c.l.b16 %v233
    %v950 = vunpack.c.h.b16 %v233
    %v951 = vunpack.c.l.b16 %v234
    %v952 = vunpack.c.h.b16 %v234
    %v953 = vunpack.c.l.b16 %v235
    %v954 = vunpack.c.h.b16 %v235
    %v955 = vunpack.c.l.b16 %v236
    %v956 = vunpack.c.h.b16 %v236
    %v957 = vunpack.c.l.b16 %v237
    %v958 = vunpack.c.h.b16 %v237
    %v959 = vunpack.c.l.b16 %v238
    %v960 = vunpack.c.h.b16 %v238
    %v961 = vunpack.c.l.b16 %v239
    %v962 = vunpack.c.h.b16 %v239
    %v963 = vunpack.c.l.b16 %v240
    %v964 = vunpack.c.h.b16 %v240
    %v965 = vunpack.c.l.b16 %v241
    %v966 = vunpack.c.h.b16 %v241
    %v967 = vunpack.c.l.b16 %v242
    %v968 = vunpack.c.h.b16 %v242
    %v969 = vunpack.c.l.b16 %v243
    %v970 = vunpack.c.h.b16 %v243
    %v971 = vunpack.c.l.b16 %v244
    %v972 = vunpack.c.h.b16 %v244
    %v973 = vunpack.c.l.b16 %v245
    %v974 = vunpack.c.h.b16 %v245
    %v975 = vunpack.c.l.b16 %v246
    %v976 = vunpack.c.h.b16 %v246
    %v977 = vunpack.c.l.b16 %v247
    %v978 = vunpack.c.h.b16 %v247
    %v979 = vunpack.c.l.b16 %v248
    %v980 = vunpack.c.h.b16 %v248
    %v981 = vunpack.c.l.b16 %v249
    %v982 = vunpack.c.h.b16 %v249
    %v983 = vunpack.c.l.b16 %v250
    %v984 = vunpack.c.h.b16 %v250
    %v985 = vunpack.c.l.b16 %v251
    %v986 = vunpack.c.h.b16 %v251
    %v987 = vunpack.c.l.b16 %v252
    %v988 = vunpack.c.h.b16 %v252
    %v989 = vunpack.c.l.b16 %v253
    %v990 = vunpack.c.h.b16 %v253
    %v991 = vunpack.c.l.b16 %v254
    %v992 = vunpack.c.h.b16 %v254
    %v993 = vunpack.c.l.b16 %v255
    %v994 = vunpack.c.h.b16 %v255
    %v995 = vunpack.c.l.b16 %v256
    %v996 = vunpack.c.h.b16 %v256
    %v997 = vunpack.c.l.b16 %v257
    %v998 = vunpack.c.h.b16 %v257
    %v999 = vunpack.c.l.b16 %v258
    %v1000 = vunpack.c.h.b16 %v258
    %v1001 = vunpack.c.l.b16 %v259
    %v1002 = vunpack.c.h.b16 %v259
    %v1003 = vunpack.c.l.b16 %v260
    %v1004 = vunpack.c.h.b16 %v260
    %v1005 = vunpack.c.l.b16 %v261
    %v1006 = vunpack.c.h.b16 %v261
    %v1007 = vunpack.c.l.b16 %v262
    %v1008 = vunpack.c.h.b16 %v262
    %v1009 = vunpack.c.l.b16 %v263
    %v1010 = vunpack.c.h.b16 %v263
    %v1011 = vunpack.c.l.b16 %v264
    %v1012 = vunpack.c.h.b16 %v264
    %v1013 = vunpack.c.l.b16 %v265
    %v1014 = vunpack.c.h.b16 %v265
    %v1015 = vunpack.c.l.b16 %v266
    %v1016 = vunpack.c.h.b16 %v266
    %v1017 = vunpack.c.l.b16 %v267
    %v1018 = vunpack.c.h.b16 %v267
    %v1019 = vunpack.c.l.b16 %v268
    %v1020 = vunpack.c.h.b16 %v268
    %v1021 = vunpack.c.l.b16 %v269
    %v1022 = vunpack.c.h.b16 %v269
    %v1023 = vunpack.c.l.b16 %v270
    %v1024 = vunpack.c.h.b16 %v270
    %v1025 = vunpack.c.l.b16 %v271
    %v1026 = vunpack.c.h.b16 %v271
    %v1027 = vunpack.c.l.b16 %v272
    %v1028 = vunpack.c.h.b16 %v272
    %v1029 = vunpack.c.l.b16 %v273
    %v1030 = vunpack.c.h.b16 %v273
    %v1031 = vunpack.c.l.b16 %v274
    %v1032 = vunpack.c.h.b16 %v274
    %v1033 = vunpack.c.l.b16 %v275
    %v1034 = vunpack.c.h.b16 %v275
    %v1035 = vunpack.c.l.b16 %v276
    %v1036 = vunpack.c.h.b16 %v276
    %v1037 = vunpack.c.l.b16 %v277
    %v1038 = vunpack.c.h.b16 %v277
    %v1039 = vunpack.c.l.b16 %v278
    %v1040 = vunpack.c.h.b16 %v278
    %v1041 = vunpack.c.l.b16 %v279
    %v1042 = vunpack.c.h.b16 %v279
    %v1043 = vunpack.c.l.b16 %v280
    %v1044 = vunpack.c.h.b16 %v280
    %v1045 = vunpack.c.l.b16 %v281
    %v1046 = vunpack.c.h.b16 %v281
    %v1047 = vunpack.c.l.b16 %v282
    %v1048 = vunpack.c.h.b16 %v282
    %v1049 = vunpack.c.l.b16 %v283
    %v1050 = vunpack.c.h.b16 %v283
    %v1051 = vunpack.c.l.b16 %v284
    %v1052 = vunpack.c.h.b16 %v284
    %v1053 = vunpack.c.l.b16 %v285
    %v1054 = vunpack.c.h.b16 %v285
    %v1055 = vunpack.c.l.b16 %v286
    %v1056 = vunpack.c.h.b16 %v286
    %v1057 = vunpack.c.l.b16 %v287
    %v1058 = vunpack.c.h.b16 %v287
    %v1059 = vunpack.c.l.b16 %v288
    %v1060 = vunpack.c.h.b16 %v288
    %v1061 = vunpack.c.l.b16 %v289
    %v1062 = vunpack.c.h.b16 %v289
    %v1063 = vunpack.c.l.b16 %v290
    %v1064 = vunpack.c.h.b16 %v290
    %v1065 = vunpack.c.l.b16 %v291
    %v1066 = vunpack.c.h.b16 %v291
    %v1067 = vunpack.c.l.b16 %v292
    %v1068 = vunpack.c.h.b16 %v292
    %v1069 = vunpack.c.l.b16 %v293
    %v1070 = vunpack.c.h.b16 %v293
    %v1071 = vunpack.c.l.b16 %v294
    %v1072 = vunpack.c.h.b16 %v294
    %v1073 = vunpack.c.l.b16 %v295
    %v1074 = vunpack.c.h.b16 %v295
    %v1075 = vunpack.c.l.b16 %v296
    %v1076 = vunpack.c.h.b16 %v296
    %v1077 = vunpack.c.l.b16 %v297
    %v1078 = vunpack.c.h.b16 %v297
    %v1079 = vunpack.c.l.b16 %v298
    %v1080 = vunpack.c.h.b16 %v298
    %v1081 = vunpack.c.l.b16 %v299
    %v1082 = vunpack.c.h.b16 %v299
    %v1083 = vunpack.c.l.b16 %v300
    %v1084 = vunpack.c.h.b16 %v300
    %v1085 = vunpack.c.l.b16 %v301
    %v1086 = vunpack.c.h.b16 %v301
    %v1087 = vunpack.c.l.b16 %v302
    %v1088 = vunpack.c.h.b16 %v302
    %v1089 = vunpack.c.l.b16 %v303
    %v1090 = vunpack.c.h.b16 %v303
    %v1091 = vunpack.c.l.b16 %v304
    %v1092 = vunpack.c.h.b16 %v304
    %v1093 = vunpack.c.l.b16 %v305
    %v1094 = vunpack.c.h.b16 %v305
    %v1095 = vunpack.c.l.b16 %v306
    %v1096 = vunpack.c.h.b16 %v306
    %v1097 = vunpack.c.l.b16 %v307
    %v1098 = vunpack.c.h.b16 %v307
    %v1099 = vunpack.c.l.b16 %v308
    %v1100 = vunpack.c.h.b16 %v308
    %v1101 = vunpack.c.l.b16 %v309
    %v1102 = vunpack.c.h.b16 %v309
    %v1103 = vunpack.c.l.b16 %v310
    %v1104 = vunpack.c.h.b16 %v310
    %v1105 = vunpack.c.l.b16 %v311
    %v1106 = vunpack.c.h.b16 %v311
    %v1107 = vunpack.c.l.b16 %v312
    %v1108 = vunpack.c.h.b16 %v312
    %v1109 = vunpack.c.l.b16 %v313
    %v1110 = vunpack.c.h.b16 %v313
    %v1111 = vunpack.c.l.b16 %v314
    %v1112 = vunpack.c.h.b16 %v314
    %v1113 = vunpack.c.l.b16 %v315
    %v1114 = vunpack.c.h.b16 %v315
    %v1115 = vunpack.c.l.b16 %v316
    %v1116 = vunpack.c.h.b16 %v316
    %v1117 = vunpack.c.l.b16 %v317
    %v1118 = vunpack.c.h.b16 %v317
    %v1119 = vunpack.c.l.b16 %v318
    %v1120 = vunpack.c.h.b16 %v318
    %v1121 = vunpack.c.l.b16 %v319
    %v1122 = vunpack.c.h.b16 %v319
    %v1123 = vunpack.c.l.b16 %v320
    %v1124 = vunpack.c.h.b16 %v320
    %v1125 = vunpack.c.l.b16 %v321
    %v1126 = vunpack.c.h.b16 %v321
    %v1127 = vunpack.c.l.b16 %v322
    %v1128 = vunpack.c.h.b16 %v322
    %v1129 = vunpack.c.l.b16 %v323
    %v1130 = vunpack.c.h.b16 %v323
    %v1131 = vunpack.c.l.b16 %v324
    %v1132 = vunpack.c.h.b16 %v324
    %v1133 = vunpack.c.l.b16 %v325
    %v1134 = vunpack.c.h.b16 %v325
    %v1135 = vunpack.c.l.b16 %v326
    %v1136 = vunpack.c.h.b16 %v326
    %v1137 = vunpack.c.l.b16 %v327
    %v1138 = vunpack.c.h.b16 %v327
    %v1139 = vunpack.c.l.b16 %v328
    %v1140 = vunpack.c.h.b16 %v328
    %v1141 = vunpack.c.l.b16 %v329
    %v1142 = vunpack.c.h.b16 %v329
    %v1143 = vunpack.c.l.b16 %v330
    %v1144 = vunpack.c.h.b16 %v330
    %v1145 = vunpack.c.l.b16 %v331
    %v1146 = vunpack.c.h.b16 %v331
    %v1147 = vunpack.c.l.b16 %v332
    %v1148 = vunpack.c.h.b16 %v332
    %v1149 = vunpack.c.l.b16 %v333
    %v1150 = vunpack.c.h.b16 %v333
    %v1151 = vunpack.c.l.b16 %v334
    %v1152 = vunpack.c.h.b16 %v334
    %v1153 = vunpack.c.l.b16 %v335
    %v1154 = vunpack.c.h.b16 %v335
    %v1155 = vunpack.c.l.b16 %v336
    %v1156 = vunpack.c.h.b16 %v336
    %v1157 = vunpack.c.l.b16 %v337
    %v1158 = vunpack.c.h.b16 %v337
    %v1159 = vunpack.c.l.b16 %v338
    %v1160 = vunpack.c.h.b16 %v338
    %v1161 = vunpack.c.l.b16 %v339
    %v1162 = vunpack.c.h.b16 %v339
    %v1163 = vunpack.c.l.b16 %v340
    %v1164 = vunpack.c.h.b16 %v340
    %v1165 = vunpack.c.l.b16 %v341
    %v1166 = vunpack.c.h.b16 %v341
    %v1167 = vunpack.c.l.b16 %v342
    %v1168 = vunpack.c.h.b16 %v342
    %v1169 = vunpack.c.l.b16 %v343
    %v1170 = vunpack.c.h.b16 %v343
    %v1171 = vunpack.c.l.b16 %v344
    %v1172 = vunpack.c.h.b16 %v344
    %v1173 = vunpack.c.l.b16 %v345
    %v1174 = vunpack.c.h.b16 %v345
    %v1175 = vunpack.c.l.b16 %v346
    %v1176 = vunpack.c.h.b16 %v346
    %v1177 = vpack.c.b16 %v667, %v665
    %v1178 = vpack.c.b16 %v668, %v666
    %v1179 = vpack.c.b16 %v671, %v669
    %v1180 = vpack.c.b16 %v672, %v670
    %v1181 = vpack.c.b16 %v675, %v673
    %v1182 = vpack.c.b16 %v676, %v674
    %v1183 = vpack.c.b16 %v679, %v677
    %v1184 = vpack.c.b16 %v680, %v678
    %v1185 = vpack.c.b16 %v683, %v681
    %v1186 = vpack.c.b16 %v684, %v682
    %v1187 = vpack.c.b16 %v687, %v685
    %v1188 = vpack.c.b16 %v688, %v686
    %v1189 = vpack.c.b16 %v691, %v689
    %v1190 = vpack.c.b16 %v692, %v690
    %v1191 = vpack.c.b16 %v695, %v693
    %v1192 = vpack.c.b16 %v696, %v694
    %v1193 = vpack.c.b16 %v699, %v697
    %v1194 = vpack.c.b16 %v700, %v698
    %v1195 = vpack.c.b16 %v703, %v701
    %v1196 = vpack.c.b16 %v704, %v702
    %v1197 = vpack.c.b16 %v707, %v705
    %v1198 = vpack.c.b16 %v708, %v706
    %v1199 = vpack.c.b16 %v711, %v709
    %v1200 = vpack.c.b16 %v712, %v710
    %v1201 = vpack.c.b16 %v715, %v713
    %v1202 = vpack.c.b16 %v716, %v714
    %v1203 = vpack.c.b16 %v719, %v717
    %v1204 = vpack.c.b16 %v720, %v718
    %v1205 = vpack.c.b16 %v723, %v721
    %v1206 = vpack.c.b16 %v724, %v722
    %v1207 = vpack.c.b16 %v727, %v725
    %v1208 = vpack.c.b16 %v728, %v726
    %v1209 = vpack.c.b16 %v731, %v729
    %v1210 = vpack.c.b16 %v732, %v730
    %v1211 = vpack.c.b16 %v735, %v733
    %v1212 = vpack.c.b16 %v736, %v734
    %v1213 = vpack.c.b16 %v739, %v737
    %v1214 = vpack.c.b16 %v740, %v738
    %v1215 = vpack.c.b16 %v743, %v741
    %v1216 = vpack.c.b16 %v744, %v742
    %v1217 = vpack.c.b16 %v747, %v745
    %v1218 = vpack.c.b16 %v748, %v746
    %v1219 = vpack.c.b16 %v751, %v749
    %v1220 = vpack.c.b16 %v752, %v750
    %v1221 = vpack.c.b16 %v755, %v753
    %v1222 = vpack.c.b16 %v756, %v754
    %v1223 = vpack.c.b16 %v759, %v757
    %v1224 = vpack.c.b16 %v760, %v758
    %v1225 = vpack.c.b16 %v763, %v761
    %v1226 = vpack.c.b16 %v764, %v762
    %v1227 = vpack.c.b16 %v767, %v765
    %v1228 = vpack.c.b16 %v768, %v766
    %v1229 = vpack.c.b16 %v771, %v769
    %v1230 = vpack.c.b16 %v772, %v770
    %v1231 = vpack.c.b16 %v775, %v773
    %v1232 = vpack.c.b16 %v776, %v774
    %v1233 = vpack.c.b16 %v779, %v777
    %v1234 = vpack.c.b16 %v780, %v778
    %v1235 = vpack.c.b16 %v783, %v781
    %v1236 = vpack.c.b16 %v784, %v782
    %v1237 = vpack.c.b16 %v787, %v785
    %v1238 = vpack.c.b16 %v788, %v786
    %v1239 = vpack.c.b16 %v791, %v789
    %v1240 = vpack.c.b16 %v792, %v790
    %v1241 = vpack.c.b16 %v795, %v793
    %v1242 = vpack.c.b16 %v796, %v794
    %v1243 = vpack.c.b16 %v799, %v797
    %v1244 = vpack.c.b16 %v800, %v798
    %v1245 = vpack.c.b16 %v803, %v801
    %v1246 = vpack.c.b16 %v804, %v802
    %v1247 = vpack.c.b16 %v807, %v805
    %v1248 = vpack.c.b16 %v808, %v806
    %v1249 = vpack.c.b16 %v811, %v809
    %v1250 = vpack.c.b16 %v812, %v810
    %v1251 = vpack.c.b16 %v815, %v813
    %v1252 = vpack.c.b16 %v816, %v814
    %v1253 = vpack.c.b16 %v819, %v817
    %v1254 = vpack.c.b16 %v820, %v818
    %v1255 = vpack.c.b16 %v823, %v821
    %v1256 = vpack.c.b16 %v824, %v822
    %v1257 = vpack.c.b16 %v827, %v825
    %v1258 = vpack.c.b16 %v828, %v826
    %v1259 = vpack.c.b16 %v831, %v829
    %v1260 = vpack.c.b16 %v832, %v830
    %v1261 = vpack.c.b16 %v835, %v833
    %v1262 = vpack.c.b16 %v836, %v834
    %v1263 = vpack.c.b16 %v839, %v837
    %v1264 = vpack.c.b16 %v840, %v838
    %v1265 = vpack.c.b16 %v843, %v841
    %v1266 = vpack.c.b16 %v844, %v842
    %v1267 = vpack.c.b16 %v847, %v845
    %v1268 = vpack.c.b16 %v848, %v846
    %v1269 = vpack.c.b16 %v851, %v849
    %v1270 = vpack.c.b16 %v852, %v850
    %v1271 = vpack.c.b16 %v855, %v853
    %v1272 = vpack.c.b16 %v856, %v854
    %v1273 = vpack.c.b16 %v859, %v857
    %v1274 = vpack.c.b16 %v860, %v858
    %v1275 = vpack.c.b16 %v863, %v861
    %v1276 = vpack.c.b16 %v864, %v862
    %v1277 = vpack.c.b16 %v867, %v865
    %v1278 = vpack.c.b16 %v868, %v866
    %v1279 = vpack.c.b16 %v871, %v869
    %v1280 = vpack.c.b16 %v872, %v870
    %v1281 = vpack.c.b16 %v875, %v873
    %v1282 = vpack.c.b16 %v876, %v874
    %v1283 = vpack.c.b16 %v879, %v877
    %v1284 = vpack.c.b16 %v880, %v878
    %v1285 = vpack.c.b16 %v883, %v881
    %v1286 = vpack.c.b16 %v884, %v882
    %v1287 = vpack.c.b16 %v887, %v885
    %v1288 = vpack.c.b16 %v888, %v886
    %v1289 = vpack.c.b16 %v891, %v889
    %v1290 = vpack.c.b16 %v892, %v890
    %v1291 = vpack.c.b16 %v895, %v893
    %v1292 = vpack.c.b16 %v896, %v894
    %v1293 = vpack.c.b16 %v899, %v897
    %v1294 = vpack.c.b16 %v900, %v898
    %v1295 = vpack.c.b16 %v903, %v901
    %v1296 = vpack.c.b16 %v904, %v902
    %v1297 = vpack.c.b16 %v907, %v905
    %v1298 = vpack.c.b16 %v908, %v906
    %v1299 = vpack.c.b16 %v911, %v909
    %v1300 = vpack.c.b16 %v912, %v910
    %v1301 = vpack.c.b16 %v915, %v913
    %v1302 = vpack.c.b16 %v916, %v914
    %v1303 = vpack.c.b16 %v919, %v917
    %v1304 = vpack.c.b16 %v920, %v918
    %v1305 = vpack.c.b16 %v923, %v921
    %v1306 = vpack.c.b16 %v924, %v922
    %v1307 = vpack.c.b16 %v927, %v925
    %v1308 = vpack.c.b16 %v928, %v926
    %v1309 = vpack.c.b16 %v931, %v929
    %v1310 = vpack.c.b16 %v932, %v930
    %v1311 = vpack.c.b16 %v935, %v933
    %v1312 = vpack.c.b16 %v936, %v934
    %v1313 = vpack.c.b16 %v939, %v937
    %v1314 = vpack.c.b16 %v940, %v938
    %v1315 = vpack.c.b16 %v943, %v941
    %v1316 = vpack.c.b16 %v944, %v942
    %v1317 = vpack.c.b16 %v947, %v945
    %v1318 = vpack.c.b16 %v948, %v946
    %v1319 = vpack.c.b16 %v951, %v949
    %v1320 = vpack.c.b16 %v952, %v950
    %v1321 = vpack.c.b16 %v955, %v953
    %v1322 = vpack.c.b16 %v956, %v954
    %v1323 = vpack.c.b16 %v959, %v957
    %v1324 = vpack.c.b16 %v960, %v958
    %v1325 = vpack.c.b16 %v963, %v961
    %v1326 = vpack.c.b16 %v964, %v962
    %v1327 = vpack.c.b16 %v967, %v965
    %v1328 = vpack.c.b16 %v968, %v966
    %v1329 = vpack.c.b16 %v971, %v969
    %v1330 = vpack.c.b16 %v972, %v970
    %v1331 = vpack.c.b16 %v975, %v973
    %v1332 = vpack.c.b16 %v976, %v974
    %v1333 = vpack.c.b16 %v979, %v977
    %v1334 = vpack.c.b16 %v980, %v978
    %v1335 = vpack.c.b16 %v983, %v981
    %v1336 = vpack.c.b16 %v984, %v982
    %v1337 = vpack.c.b16 %v987, %v985
    %v1338 = vpack.c.b16 %v988, %v986
    %v1339 = vpack.c.b16 %v991, %v989
    %v1340 = vpack.c.b16 %v992, %v990
    %v1341 = vpack.c.b16 %v995, %v993
    %v1342 = vpack.c.b16 %v996, %v994
    %v1343 = vpack.c.b16 %v999, %v997
    %v1344 = vpack.c.b16 %v1000, %v998
    %v1345 = vpack.c.b16 %v1003, %v1001
    %v1346 = vpack.c.b16 %v1004, %v1002
    %v1347 = vpack.c.b16 %v1007, %v1005
    %v1348 = vpack.c.b16 %v1008, %v1006
    %v1349 = vpack.c.b16 %v1011, %v1009
    %v1350 = vpack.c.b16 %v1012, %v1010
    %v1351 = vpack.c.b16 %v1015, %v1013
    %v1352 = vpack.c.b16 %v1016, %v1014
    %v1353 = vpack.c.b16 %v1019, %v1017
    %v1354 = vpack.c.b16 %v1020, %v1018
    %v1355 = vpack.c.b16 %v1023, %v1021
    %v1356 = vpack.c.b16 %v1024, %v1022
    %v1357 = vpack.c.b16 %v1027, %v1025
    %v1358 = vpack.c.b16 %v1028, %v1026
    %v1359 = vpack.c.b16 %v1031, %v1029
    %v1360 = vpack.c.b16 %v1032, %v1030
    %v1361 = vpack.c.b16 %v1035, %v1033
    %v1362 = vpack.c.b16 %v1036, %v1034
    %v1363 = vpack.c.b16 %v1039, %v1037
    %v1364 = vpack.c.b16 %v1040, %v1038
    %v1365 = vpack.c.b16 %v1043, %v1041
    %v1366 = vpack.c.b16 %v1044, %v1042
    %v1367 = vpack.c.b16 %v1047, %v1045
    %v1368 = vpack.c.b16 %v1048, %v1046
    %v1369 = vpack.c.b16 %v1051, %v1049
    %v1370 = vpack.c.b16 %v1052, %v1050
    %v1371 = vpack.c.b16 %v1055, %v1053
    %v1372 = vpack.c.b16 %v1056, %v1054
    %v1373 = vpack.c.b16 %v1059, %v1057
    %v1374 = vpack.c.b16 %v1060, %v1058
    %v1375 = vpack.c.b16 %v1063, %v1061
    %v1376 = vpack.c.b16 %v1064, %v1062
    %v1377 = vpack.c.b16 %v1067, %v1065
    %v1378 = vpack.c.b16 %v1068, %v1066
    %v1379 = vpack.c.b16 %v1071, %v1069
    %v1380 = vpack.c.b16 %v1072, %v1070
    %v1381 = vpack.c.b16 %v1075, %v1073
    %v1382 = vpack.c.b16 %v1076, %v1074
    %v1383 = vpack.c.b16 %v1079, %v1077
    %v1384 = vpack.c.b16 %v1080, %v1078
    %v1385 = vpack.c.b16 %v1083, %v1081
    %v1386 = vpack.c.b16 %v1084, %v1082
    %v1387 = vpack.c.b16 %v1087, %v1085
    %v1388 = vpack.c.b16 %v1088, %v1086
    %v1389 = vpack.c.b16 %v1091, %v1089
    %v1390 = vpack.c.b16 %v1092, %v1090
    %v1391 = vpack.c.b16 %v1095, %v1093
    %v1392 = vpack.c.b16 %v1096, %v1094
    %v1393 = vpack.c.b16 %v1099, %v1097
    %v1394 = vpack.c.b16 %v1100, %v1098
    %v1395 = vpack.c.b16 %v1103, %v1101
    %v1396 = vpack.c.b16 %v1104, %v1102
    %v1397 = vpack.c.b16 %v1107, %v1105
    %v1398 = vpack.c.b16 %v1108, %v1106
    %v1399 = vpack.c.b16 %v1111, %v1109
    %v1400 = vpack.c.b16 %v1112, %v1110
    %v1401 = vpack.c.b16 %v1115, %v1113
    %v1402 = vpack.c.b16 %v1116, %v1114
    %v1403 = vpack.c.b16 %v1119, %v1117
    %v1404 = vpack.c.b16 %v1120, %v1118
    %v1405 = vpack.c.b16 %v1123, %v1121
    %v1406 = vpack.c.b16 %v1124, %v1122
    %v1407 = vpack.c.b16 %v1127, %v1125
    %v1408 = vpack.c.b16 %v1128, %v1126
    %v1409 = vpack.c.b16 %v1131, %v1129
    %v1410 = vpack.c.b16 %v1132, %v1130
    %v1411 = vpack.c.b16 %v1135, %v1133
    %v1412 = vpack.c.b16 %v1136, %v1134
    %v1413 = vpack.c.b16 %v1139, %v1137
    %v1414 = vpack.c.b16 %v1140, %v1138
    %v1415 = vpack.c.b16 %v1143, %v1141
    %v1416 = vpack.c.b16 %v1144, %v1142
    %v1417 = vpack.c.b16 %v1147, %v1145
    %v1418 = vpack.c.b16 %v1148, %v1146
    %v1419 = vpack.c.b16 %v1151, %v1149
    %v1420 = vpack.c.b16 %v1152, %v1150
    %v1421 = vpack.c.b16 %v1155, %v1153
    %v1422 = vpack.c.b16 %v1156, %v1154
    %v1423 = vpack.c.b16 %v1159, %v1157
    %v1424 = vpack.c.b16 %v1160, %v1158
    %v1425 = vpack.c.b16 %v1163, %v1161
    %v1426 = vpack.c.b16 %v1164, %v1162
    %v1427 = vpack.c.b16 %v1167, %v1165
    %v1428 = vpack.c.b16 %v1168, %v1166
    %v1429 = vpack.c.b16 %v1171, %v1169
    %v1430 = vpack.c.b16 %v1172, %v1170
    %v1431 = vpack.c.b16 %v1175, %v1173
    %v1432 = vpack.c.b16 %v1176, %v1174
    %1689 = vmatpush.bf16.msra.mxu0 %v1191
    %1690 = vmatpush.bf16.msra.mxu0 %v1189
    %1691 = vmatpush.bf16.msra.mxu0 %v1187
    %1692 = vmatpush.bf16.msra.mxu0 %v1185
    %1693 = vmatpush.bf16.msra.mxu0 %v1183
    %1694 = vmatpush.bf16.msra.mxu0 %v1181
    %1695 = vmatpush.bf16.msra.mxu0 %v1179
    %1696 = vmatpush.bf16.msra.mxu0 %v1177
    %1697 = vmatmul.bf16.gmra.mxu0 %v377
    %v1698 = vpop.f32.mrf.mxu0
    %v1699 = vadd.f32 %v349, %v1698
    %v1700 = vpop.f32.mrf.mxu0
    %1701 = vdwg.mxu0
    %1702 = vmatpush.bf16.msra.mxu0 %v1207
    %1703 = vmatpush.bf16.msra.mxu0 %v1205
    %1704 = vmatpush.bf16.msra.mxu0 %v1203
    %1705 = vmatpush.bf16.msra.mxu0 %v1201
    %1706 = vmatpush.bf16.msra.mxu0 %v1199
    %1707 = vmatpush.bf16.msra.mxu0 %v1197
    %1708 = vmatpush.bf16.msra.mxu0 %v1195
    %1709 = vmatpush.bf16.msra.mxu0 %v1193
    %1710 = vmatmul.bf16.gmra.mxu0 %v378
    %v1711 = vpop.f32.mrf.mxu0
    %v1712 = vadd.f32 %v1699, %v1711
    %v1713 = vpop.f32.mrf.mxu0
    %1714 = vdwg.mxu0
    %1715 = vmatpush.bf16.msra.mxu0 %v1223
    %1716 = vmatpush.bf16.msra.mxu0 %v1221
    %1717 = vmatpush.bf16.msra.mxu0 %v1219
    %1718 = vmatpush.bf16.msra.mxu0 %v1217
    %1719 = vmatpush.bf16.msra.mxu0 %v1215
    %1720 = vmatpush.bf16.msra.mxu0 %v1213
    %1721 = vmatpush.bf16.msra.mxu0 %v1211
    %1722 = vmatpush.bf16.msra.mxu0 %v1209
    %1723 = vmatmul.bf16.gmra.mxu0 %v379
    %v1724 = vpop.f32.mrf.mxu0
    %v1725 = vadd.f32 %v1712, %v1724
    %v1726 = vpop.f32.mrf.mxu0
    %1727 = vdwg.mxu0
    %1728 = vmatpush.bf16.msra.mxu0 %v1239
    %1729 = vmatpush.bf16.msra.mxu0 %v1237
    %1730 = vmatpush.bf16.msra.mxu0 %v1235
    %1731 = vmatpush.bf16.msra.mxu0 %v1233
    %1732 = vmatpush.bf16.msra.mxu0 %v1231
    %1733 = vmatpush.bf16.msra.mxu0 %v1229
    %1734 = vmatpush.bf16.msra.mxu0 %v1227
    %1735 = vmatpush.bf16.msra.mxu0 %v1225
    %1736 = vmatmul.bf16.gmra.mxu0 %v380
    %v1737 = vpop.f32.mrf.mxu0
    %v1738 = vadd.f32 %v1725, %v1737
    %v1739 = vpop.f32.mrf.mxu0
    %1740 = vdwg.mxu0
    %1741 = vmatpush.bf16.msra.mxu0 %v1255
    %1742 = vmatpush.bf16.msra.mxu0 %v1253
    %1743 = vmatpush.bf16.msra.mxu0 %v1251
    %1744 = vmatpush.bf16.msra.mxu0 %v1249
    %1745 = vmatpush.bf16.msra.mxu0 %v1247
    %1746 = vmatpush.bf16.msra.mxu0 %v1245
    %1747 = vmatpush.bf16.msra.mxu0 %v1243
    %1748 = vmatpush.bf16.msra.mxu0 %v1241
    %1749 = vmatmul.bf16.gmra.mxu0 %v381
    %v1750 = vpop.f32.mrf.mxu0
    %v1751 = vadd.f32 %v1738, %v1750
    %v1752 = vpop.f32.mrf.mxu0
    %1753 = vdwg.mxu0
    %1754 = vmatpush.bf16.msra.mxu0 %v1271
    %1755 = vmatpush.bf16.msra.mxu0 %v1269
    %1756 = vmatpush.bf16.msra.mxu0 %v1267
    %1757 = vmatpush.bf16.msra.mxu0 %v1265
    %1758 = vmatpush.bf16.msra.mxu0 %v1263
    %1759 = vmatpush.bf16.msra.mxu0 %v1261
    %1760 = vmatpush.bf16.msra.mxu0 %v1259
    %1761 = vmatpush.bf16.msra.mxu0 %v1257
    %1762 = vmatmul.bf16.gmra.mxu0 %v382
    %v1763 = vpop.f32.mrf.mxu0
    %v1764 = vadd.f32 %v1751, %v1763
    %v1765 = vpop.f32.mrf.mxu0
    %1766 = vdwg.mxu0
    %1767 = vmatpush.bf16.msra.mxu0 %v1287
    %1768 = vmatpush.bf16.msra.mxu0 %v1285
    %1769 = vmatpush.bf16.msra.mxu0 %v1283
    %1770 = vmatpush.bf16.msra.mxu0 %v1281
    %1771 = vmatpush.bf16.msra.mxu0 %v1279
    %1772 = vmatpush.bf16.msra.mxu0 %v1277
    %1773 = vmatpush.bf16.msra.mxu0 %v1275
    %1774 = vmatpush.bf16.msra.mxu0 %v1273
    %1775 = vmatmul.bf16.gmra.mxu0 %v383
    %v1776 = vpop.f32.mrf.mxu0
    %v1777 = vadd.f32 %v1764, %v1776
    %v1778 = vpop.f32.mrf.mxu0
    %1779 = vdwg.mxu0
    %1780 = vmatpush.bf16.msra.mxu0 %v1303
    %1781 = vmatpush.bf16.msra.mxu0 %v1301
    %1782 = vmatpush.bf16.msra.mxu0 %v1299
    %1783 = vmatpush.bf16.msra.mxu0 %v1297
    %1784 = vmatpush.bf16.msra.mxu0 %v1295
    %1785 = vmatpush.bf16.msra.mxu0 %v1293
    %1786 = vmatpush.bf16.msra.mxu0 %v1291
    %1787 = vmatpush.bf16.msra.mxu0 %v1289
    %1788 = vmatmul.bf16.gmra.mxu0 %v384
    %v1789 = vpop.f32.mrf.mxu0
    %v1790 = vadd.f32 %v1777, %v1789
    %v1791 = vpop.f32.mrf.mxu0
    %1792 = vdwg.mxu0
    %1793 = vmatpush.bf16.msra.mxu0 %v1319
    %1794 = vmatpush.bf16.msra.mxu0 %v1317
    %1795 = vmatpush.bf16.msra.mxu0 %v1315
    %1796 = vmatpush.bf16.msra.mxu0 %v1313
    %1797 = vmatpush.bf16.msra.mxu0 %v1311
    %1798 = vmatpush.bf16.msra.mxu0 %v1309
    %1799 = vmatpush.bf16.msra.mxu0 %v1307
    %1800 = vmatpush.bf16.msra.mxu0 %v1305
    %1801 = vmatmul.bf16.gmra.mxu0 %v385
    %v1802 = vpop.f32.mrf.mxu0
    %v1803 = vadd.f32 %v1790, %v1802
    %v1804 = vpop.f32.mrf.mxu0
    %1805 = vdwg.mxu0
    %1806 = vmatpush.bf16.msra.mxu0 %v1335
    %1807 = vmatpush.bf16.msra.mxu0 %v1333
    %1808 = vmatpush.bf16.msra.mxu0 %v1331
    %1809 = vmatpush.bf16.msra.mxu0 %v1329
    %1810 = vmatpush.bf16.msra.mxu0 %v1327
    %1811 = vmatpush.bf16.msra.mxu0 %v1325
    %1812 = vmatpush.bf16.msra.mxu0 %v1323
    %1813 = vmatpush.bf16.msra.mxu0 %v1321
    %1814 = vmatmul.bf16.gmra.mxu0 %v386
    %v1815 = vpop.f32.mrf.mxu0
    %v1816 = vadd.f32 %v1803, %v1815
    %v1817 = vpop.f32.mrf.mxu0
    %1818 = vdwg.mxu0
    %1819 = vmatpush.bf16.msra.mxu0 %v1351
    %1820 = vmatpush.bf16.msra.mxu0 %v1349
    %1821 = vmatpush.bf16.msra.mxu0 %v1347
    %1822 = vmatpush.bf16.msra.mxu0 %v1345
    %1823 = vmatpush.bf16.msra.mxu0 %v1343
    %1824 = vmatpush.bf16.msra.mxu0 %v1341
    %1825 = vmatpush.bf16.msra.mxu0 %v1339
    %1826 = vmatpush.bf16.msra.mxu0 %v1337
    %1827 = vmatmul.bf16.gmra.mxu0 %v387
    %v1828 = vpop.f32.mrf.mxu0
    %v1829 = vadd.f32 %v1816, %v1828
    %v1830 = vpop.f32.mrf.mxu0
    %1831 = vdwg.mxu0
    %1832 = vmatpush.bf16.msra.mxu0 %v1367
    %1833 = vmatpush.bf16.msra.mxu0 %v1365
    %1834 = vmatpush.bf16.msra.mxu0 %v1363
    %1835 = vmatpush.bf16.msra.mxu0 %v1361
    %1836 = vmatpush.bf16.msra.mxu0 %v1359
    %1837 = vmatpush.bf16.msra.mxu0 %v1357
    %1838 = vmatpush.bf16.msra.mxu0 %v1355
    %1839 = vmatpush.bf16.msra.mxu0 %v1353
    %1840 = vmatmul.bf16.gmra.mxu0 %v388
    %v1841 = vpop.f32.mrf.mxu0
    %v1842 = vadd.f32 %v1829, %v1841
    %v1843 = vpop.f32.mrf.mxu0
    %1844 = vdwg.mxu0
    %1845 = vmatpush.bf16.msra.mxu0 %v1383
    %1846 = vmatpush.bf16.msra.mxu0 %v1381
    %1847 = vmatpush.bf16.msra.mxu0 %v1379
    %1848 = vmatpush.bf16.msra.mxu0 %v1377
    %1849 = vmatpush.bf16.msra.mxu0 %v1375
    %1850 = vmatpush.bf16.msra.mxu0 %v1373
    %1851 = vmatpush.bf16.msra.mxu0 %v1371
    %1852 = vmatpush.bf16.msra.mxu0 %v1369
    %1853 = vmatmul.bf16.gmra.mxu0 %v389
    %v1854 = vpop.f32.mrf.mxu0
    %v1855 = vadd.f32 %v1842, %v1854
    %v1856 = vpop.f32.mrf.mxu0
    %1857 = vdwg.mxu0
    %1858 = vmatpush.bf16.msra.mxu0 %v1399
    %1859 = vmatpush.bf16.msra.mxu0 %v1397
    %1860 = vmatpush.bf16.msra.mxu0 %v1395
    %1861 = vmatpush.bf16.msra.mxu0 %v1393
    %1862 = vmatpush.bf16.msra.mxu0 %v1391
    %1863 = vmatpush.bf16.msra.mxu0 %v1389
    %1864 = vmatpush.bf16.msra.mxu0 %v1387
    %1865 = vmatpush.bf16.msra.mxu0 %v1385
    %1866 = vmatmul.bf16.gmra.mxu0 %v390
    %v1867 = vpop.f32.mrf.mxu0
    %v1868 = vadd.f32 %v1855, %v1867
    %v1869 = vpop.f32.mrf.mxu0
    %1870 = vdwg.mxu0
    %1871 = vmatpush.bf16.msra.mxu0 %v1415
    %1872 = vmatpush.bf16.msra.mxu0 %v1413
    %1873 = vmatpush.bf16.msra.mxu0 %v1411
    %1874 = vmatpush.bf16.msra.mxu0 %v1409
    %1875 = vmatpush.bf16.msra.mxu0 %v1407
    %1876 = vmatpush.bf16.msra.mxu0 %v1405
    %1877 = vmatpush.bf16.msra.mxu0 %v1403
    %1878 = vmatpush.bf16.msra.mxu0 %v1401
    %1879 = vmatmul.bf16.gmra.mxu0 %v391
    %v1880 = vpop.f32.mrf.mxu0
    %v1881 = vadd.f32 %v1868, %v1880
    %v1882 = vpop.f32.mrf.mxu0
    %1883 = vdwg.mxu0
    %1884 = vmatpush.bf16.msra.mxu0 %v1431
    %1885 = vmatpush.bf16.msra.mxu0 %v1429
    %1886 = vmatpush.bf16.msra.mxu0 %v1427
    %1887 = vmatpush.bf16.msra.mxu0 %v1425
    %1888 = vmatpush.bf16.msra.mxu0 %v1423
    %1889 = vmatpush.bf16.msra.mxu0 %v1421
    %1890 = vmatpush.bf16.msra.mxu0 %v1419
    %1891 = vmatpush.bf16.msra.mxu0 %v1417
    %1892 = vmatmul.bf16.gmra.mxu0 %v392
    %v1893 = vpop.f32.mrf.mxu0
    %v1894 = vadd.f32 %v1881, %v1893
    %v1895 = vpop.f32.mrf.mxu0
    %1896 = vdwg.mxu0
    %1897 = vmatpush.bf16.msra.mxu0 %v1192
    %1898 = vmatpush.bf16.msra.mxu0 %v1190
    %1899 = vmatpush.bf16.msra.mxu0 %v1188
    %1900 = vmatpush.bf16.msra.mxu0 %v1186
    %1901 = vmatpush.bf16.msra.mxu0 %v1184
    %1902 = vmatpush.bf16.msra.mxu0 %v1182
    %1903 = vmatpush.bf16.msra.mxu0 %v1180
    %1904 = vmatpush.bf16.msra.mxu0 %v1178
    %1905 = vmatmul.bf16.gmra.mxu0 %v377
    %v1906 = vpop.f32.mrf.mxu0
    %v1907 = vadd.f32 %v350, %v1906
    %v1908 = vpop.f32.mrf.mxu0
    %1909 = vdwg.mxu0
    %1910 = vmatpush.bf16.msra.mxu0 %v1208
    %1911 = vmatpush.bf16.msra.mxu0 %v1206
    %1912 = vmatpush.bf16.msra.mxu0 %v1204
    %1913 = vmatpush.bf16.msra.mxu0 %v1202
    %1914 = vmatpush.bf16.msra.mxu0 %v1200
    %1915 = vmatpush.bf16.msra.mxu0 %v1198
    %1916 = vmatpush.bf16.msra.mxu0 %v1196
    %1917 = vmatpush.bf16.msra.mxu0 %v1194
    %1918 = vmatmul.bf16.gmra.mxu0 %v378
    %v1919 = vpop.f32.mrf.mxu0
    %v1920 = vadd.f32 %v1907, %v1919
    %v1921 = vpop.f32.mrf.mxu0
    %1922 = vdwg.mxu0
    %1923 = vmatpush.bf16.msra.mxu0 %v1224
    %1924 = vmatpush.bf16.msra.mxu0 %v1222
    %1925 = vmatpush.bf16.msra.mxu0 %v1220
    %1926 = vmatpush.bf16.msra.mxu0 %v1218
    %1927 = vmatpush.bf16.msra.mxu0 %v1216
    %1928 = vmatpush.bf16.msra.mxu0 %v1214
    %1929 = vmatpush.bf16.msra.mxu0 %v1212
    %1930 = vmatpush.bf16.msra.mxu0 %v1210
    %1931 = vmatmul.bf16.gmra.mxu0 %v379
    %v1932 = vpop.f32.mrf.mxu0
    %v1933 = vadd.f32 %v1920, %v1932
    %v1934 = vpop.f32.mrf.mxu0
    %1935 = vdwg.mxu0
    %1936 = vmatpush.bf16.msra.mxu0 %v1240
    %1937 = vmatpush.bf16.msra.mxu0 %v1238
    %1938 = vmatpush.bf16.msra.mxu0 %v1236
    %1939 = vmatpush.bf16.msra.mxu0 %v1234
    %1940 = vmatpush.bf16.msra.mxu0 %v1232
    %1941 = vmatpush.bf16.msra.mxu0 %v1230
    %1942 = vmatpush.bf16.msra.mxu0 %v1228
    %1943 = vmatpush.bf16.msra.mxu0 %v1226
    %1944 = vmatmul.bf16.gmra.mxu0 %v380
    %v1945 = vpop.f32.mrf.mxu0
    %v1946 = vadd.f32 %v1933, %v1945
    %v1947 = vpop.f32.mrf.mxu0
    %1948 = vdwg.mxu0
    %1949 = vmatpush.bf16.msra.mxu0 %v1256
    %1950 = vmatpush.bf16.msra.mxu0 %v1254
    %1951 = vmatpush.bf16.msra.mxu0 %v1252
    %1952 = vmatpush.bf16.msra.mxu0 %v1250
    %1953 = vmatpush.bf16.msra.mxu0 %v1248
    %1954 = vmatpush.bf16.msra.mxu0 %v1246
    %1955 = vmatpush.bf16.msra.mxu0 %v1244
    %1956 = vmatpush.bf16.msra.mxu0 %v1242
    %1957 = vmatmul.bf16.gmra.mxu0 %v381
    %v1958 = vpop.f32.mrf.mxu0
    %v1959 = vadd.f32 %v1946, %v1958
    %v1960 = vpop.f32.mrf.mxu0
    %1961 = vdwg.mxu0
    %1962 = vmatpush.bf16.msra.mxu0 %v1272
    %1963 = vmatpush.bf16.msra.mxu0 %v1270
    %1964 = vmatpush.bf16.msra.mxu0 %v1268
    %1965 = vmatpush.bf16.msra.mxu0 %v1266
    %1966 = vmatpush.bf16.msra.mxu0 %v1264
    %1967 = vmatpush.bf16.msra.mxu0 %v1262
    %1968 = vmatpush.bf16.msra.mxu0 %v1260
    %1969 = vmatpush.bf16.msra.mxu0 %v1258
    %1970 = vmatmul.bf16.gmra.mxu0 %v382
    %v1971 = vpop.f32.mrf.mxu0
    %v1972 = vadd.f32 %v1959, %v1971
    %v1973 = vpop.f32.mrf.mxu0
    %1974 = vdwg.mxu0
    %1975 = vmatpush.bf16.msra.mxu0 %v1288
    %1976 = vmatpush.bf16.msra.mxu0 %v1286
    %1977 = vmatpush.bf16.msra.mxu0 %v1284
    %1978 = vmatpush.bf16.msra.mxu0 %v1282
    %1979 = vmatpush.bf16.msra.mxu0 %v1280
    %1980 = vmatpush.bf16.msra.mxu0 %v1278
    %1981 = vmatpush.bf16.msra.mxu0 %v1276
    %1982 = vmatpush.bf16.msra.mxu0 %v1274
    %1983 = vmatmul.bf16.gmra.mxu0 %v383
    %v1984 = vpop.f32.mrf.mxu0
    %v1985 = vadd.f32 %v1972, %v1984
    %v1986 = vpop.f32.mrf.mxu0
    %1987 = vdwg.mxu0
    %1988 = vmatpush.bf16.msra.mxu0 %v1304
    %1989 = vmatpush.bf16.msra.mxu0 %v1302
    %1990 = vmatpush.bf16.msra.mxu0 %v1300
    %1991 = vmatpush.bf16.msra.mxu0 %v1298
    %1992 = vmatpush.bf16.msra.mxu0 %v1296
    %1993 = vmatpush.bf16.msra.mxu0 %v1294
    %1994 = vmatpush.bf16.msra.mxu0 %v1292
    %1995 = vmatpush.bf16.msra.mxu0 %v1290
    %1996 = vmatmul.bf16.gmra.mxu0 %v384
    %v1997 = vpop.f32.mrf.mxu0
    %v1998 = vadd.f32 %v1985, %v1997
    %v1999 = vpop.f32.mrf.mxu0
    %2000 = vdwg.mxu0
    %2001 = vmatpush.bf16.msra.mxu0 %v1320
    %2002 = vmatpush.bf16.msra.mxu0 %v1318
    %2003 = vmatpush.bf16.msra.mxu0 %v1316
    %2004 = vmatpush.bf16.msra.mxu0 %v1314
    %2005 = vmatpush.bf16.msra.mxu0 %v1312
    %2006 = vmatpush.bf16.msra.mxu0 %v1310
    %2007 = vmatpush.bf16.msra.mxu0 %v1308
    %2008 = vmatpush.bf16.msra.mxu0 %v1306
    %2009 = vmatmul.bf16.gmra.mxu0 %v385
    %v2010 = vpop.f32.mrf.mxu0
    %v2011 = vadd.f32 %v1998, %v2010
    %v2012 = vpop.f32.mrf.mxu0
    %2013 = vdwg.mxu0
    %2014 = vmatpush.bf16.msra.mxu0 %v1336
    %2015 = vmatpush.bf16.msra.mxu0 %v1334
    %2016 = vmatpush.bf16.msra.mxu0 %v1332
    %2017 = vmatpush.bf16.msra.mxu0 %v1330
    %2018 = vmatpush.bf16.msra.mxu0 %v1328
    %2019 = vmatpush.bf16.msra.mxu0 %v1326
    %2020 = vmatpush.bf16.msra.mxu0 %v1324
    %2021 = vmatpush.bf16.msra.mxu0 %v1322
    %2022 = vmatmul.bf16.gmra.mxu0 %v386
    %v2023 = vpop.f32.mrf.mxu0
    %v2024 = vadd.f32 %v2011, %v2023
    %v2025 = vpop.f32.mrf.mxu0
    %2026 = vdwg.mxu0
    %2027 = vmatpush.bf16.msra.mxu0 %v1352
    %2028 = vmatpush.bf16.msra.mxu0 %v1350
    %2029 = vmatpush.bf16.msra.mxu0 %v1348
    %2030 = vmatpush.bf16.msra.mxu0 %v1346
    %2031 = vmatpush.bf16.msra.mxu0 %v1344
    %2032 = vmatpush.bf16.msra.mxu0 %v1342
    %2033 = vmatpush.bf16.msra.mxu0 %v1340
    %2034 = vmatpush.bf16.msra.mxu0 %v1338
    %2035 = vmatmul.bf16.gmra.mxu0 %v387
    %v2036 = vpop.f32.mrf.mxu0
    %v2037 = vadd.f32 %v2024, %v2036
    %v2038 = vpop.f32.mrf.mxu0
    %2039 = vdwg.mxu0
    %2040 = vmatpush.bf16.msra.mxu0 %v1368
    %2041 = vmatpush.bf16.msra.mxu0 %v1366
    %2042 = vmatpush.bf16.msra.mxu0 %v1364
    %2043 = vmatpush.bf16.msra.mxu0 %v1362
    %2044 = vmatpush.bf16.msra.mxu0 %v1360
    %2045 = vmatpush.bf16.msra.mxu0 %v1358
    %2046 = vmatpush.bf16.msra.mxu0 %v1356
    %2047 = vmatpush.bf16.msra.mxu0 %v1354
    %2048 = vmatmul.bf16.gmra.mxu0 %v388
    %v2049 = vpop.f32.mrf.mxu0
    %v2050 = vadd.f32 %v2037, %v2049
    %v2051 = vpop.f32.mrf.mxu0
    %2052 = vdwg.mxu0
    %2053 = vmatpush.bf16.msra.mxu0 %v1384
    %2054 = vmatpush.bf16.msra.mxu0 %v1382
    %2055 = vmatpush.bf16.msra.mxu0 %v1380
    %2056 = vmatpush.bf16.msra.mxu0 %v1378
    %2057 = vmatpush.bf16.msra.mxu0 %v1376
    %2058 = vmatpush.bf16.msra.mxu0 %v1374
    %2059 = vmatpush.bf16.msra.mxu0 %v1372
    %2060 = vmatpush.bf16.msra.mxu0 %v1370
    %2061 = vmatmul.bf16.gmra.mxu0 %v389
    %v2062 = vpop.f32.mrf.mxu0
    %v2063 = vadd.f32 %v2050, %v2062
    %v2064 = vpop.f32.mrf.mxu0
    %2065 = vdwg.mxu0
    %2066 = vmatpush.bf16.msra.mxu0 %v1400
    %2067 = vmatpush.bf16.msra.mxu0 %v1398
    %2068 = vmatpush.bf16.msra.mxu0 %v1396
    %2069 = vmatpush.bf16.msra.mxu0 %v1394
    %2070 = vmatpush.bf16.msra.mxu0 %v1392
    %2071 = vmatpush.bf16.msra.mxu0 %v1390
    %2072 = vmatpush.bf16.msra.mxu0 %v1388
    %2073 = vmatpush.bf16.msra.mxu0 %v1386
    %2074 = vmatmul.bf16.gmra.mxu0 %v390
    %v2075 = vpop.f32.mrf.mxu0
    %v2076 = vadd.f32 %v2063, %v2075
    %v2077 = vpop.f32.mrf.mxu0
    %2078 = vdwg.mxu0
    %2079 = vmatpush.bf16.msra.mxu0 %v1416
    %2080 = vmatpush.bf16.msra.mxu0 %v1414
    %2081 = vmatpush.bf16.msra.mxu0 %v1412
    %2082 = vmatpush.bf16.msra.mxu0 %v1410
    %2083 = vmatpush.bf16.msra.mxu0 %v1408
    %2084 = vmatpush.bf16.msra.mxu0 %v1406
    %2085 = vmatpush.bf16.msra.mxu0 %v1404
    %2086 = vmatpush.bf16.msra.mxu0 %v1402
    %2087 = vmatmul.bf16.gmra.mxu0 %v391
    %v2088 = vpop.f32.mrf.mxu0
    %v2089 = vadd.f32 %v2076, %v2088
    %v2090 = vpop.f32.mrf.mxu0
    %2091 = vdwg.mxu0
    %2092 = vmatpush.bf16.msra.mxu0 %v1432
    %2093 = vmatpush.bf16.msra.mxu0 %v1430
    %2094 = vmatpush.bf16.msra.mxu0 %v1428
    %2095 = vmatpush.bf16.msra.mxu0 %v1426
    %2096 = vmatpush.bf16.msra.mxu0 %v1424
    %2097 = vmatpush.bf16.msra.mxu0 %v1422
    %2098 = vmatpush.bf16.msra.mxu0 %v1420
    %2099 = vmatpush.bf16.msra.mxu0 %v1418
    %2100 = vmatmul.bf16.gmra.mxu0 %v392
    %v2101 = vpop.f32.mrf.mxu0
    %v2102 = vadd.f32 %v2089, %v2101
    %v2103 = vpop.f32.mrf.mxu0
    %2104 = vdwg.mxu0
    %v2105 = vmax.f32 %v1894, 0.0
    %v2106 = vmax.f32 %v2102, 0.0
    %2107 = vst [vmem:[#allocation10] sm:$0xff] %v2105
    %2108 = vst [vmem:[#allocation10 + $0x8] sm:$0xff] %v2106
    %v2109 = vld [vmem:[#allocation8] sm:$0xff]
    %v2110 = vld [vmem:[#allocation8 + $0x8] sm:$0xff]
    %v2111 = vld [vmem:[#allocation8 + $0x10] sm:$0xff]
    %v2112 = vld [vmem:[#allocation8 + $0x18] sm:$0xff]
    %v2113 = vld [vmem:[#allocation8 + $0x20] sm:$0xff]
    %v2114 = vld [vmem:[#allocation8 + $0x28] sm:$0xff]
    %v2115 = vld [vmem:[#allocation8 + $0x30] sm:$0xff]
    %v2116 = vld [vmem:[#allocation8 + $0x38] sm:$0xff]
    %v2117 = vld [vmem:[#allocation8 + $0x40] sm:$0xff]
    %v2118 = vld [vmem:[#allocation8 + $0x48] sm:$0xff]
    %v2119 = vld [vmem:[#allocation8 + $0x50] sm:$0xff]
    %v2120 = vld [vmem:[#allocation8 + $0x58] sm:$0xff]
    %v2121 = vld [vmem:[#allocation8 + $0x60] sm:$0xff]
    %v2122 = vld [vmem:[#allocation8 + $0x68] sm:$0xff]
    %v2123 = vld [vmem:[#allocation8 + $0x70] sm:$0xff]
    %v2124 = vld [vmem:[#allocation8 + $0x78] sm:$0xff]
    %v2125 = vld [vmem:[#allocation8 + $0x80] sm:$0xff]
    %v2126 = vld [vmem:[#allocation8 + $0x88] sm:$0xff]
    %v2127 = vld [vmem:[#allocation8 + $0x90] sm:$0xff]
    %v2128 = vld [vmem:[#allocation8 + $0x98] sm:$0xff]
    %v2129 = vld [vmem:[#allocation8 + $0xa0] sm:$0xff]
    %v2130 = vld [vmem:[#allocation8 + $0xa8] sm:$0xff]
    %v2131 = vld [vmem:[#allocation8 + $0xb0] sm:$0xff]
    %v2132 = vld [vmem:[#allocation8 + $0xb8] sm:$0xff]
    %v2133 = vld [vmem:[#allocation8 + $0xc0] sm:$0xff]
    %v2134 = vld [vmem:[#allocation8 + $0xc8] sm:$0xff]
    %v2135 = vld [vmem:[#allocation8 + $0xd0] sm:$0xff]
    %v2136 = vld [vmem:[#allocation8 + $0xd8] sm:$0xff]
    %v2137 = vld [vmem:[#allocation8 + $0xe0] sm:$0xff]
    %v2138 = vld [vmem:[#allocation8 + $0xe8] sm:$0xff]
    %v2139 = vld [vmem:[#allocation8 + $0xf0] sm:$0xff]
    %v2140 = vld [vmem:[#allocation8 + $0xf8] sm:$0xff]
    %v2141 = vld [vmem:[%s4] sm:$0x1]
    %v2143 = vperm.slane %v2141, 0
    %2145 = vmatpush.msra.mxu0 %v2124
    %2146 = vmatpush.msra.mxu0 %v2123
    %2147 = vmatpush.msra.mxu0 %v2122
    %2148 = vmatpush.msra.mxu0 %v2121
    %2149 = vmatpush.msra.mxu0 %v2120
    %2150 = vmatpush.msra.mxu0 %v2119
    %2151 = vmatpush.msra.mxu0 %v2118
    %2152 = vmatpush.msra.mxu0 %v2117
    %2153 = vmatpush.msra.mxu0 %v2116
    %2154 = vmatpush.msra.mxu0 %v2115
    %2155 = vmatpush.msra.mxu0 %v2114
    %2156 = vmatpush.msra.mxu0 %v2113
    %2157 = vmatpush.msra.mxu0 %v2112
    %2158 = vmatpush.msra.mxu0 %v2111
    %2159 = vmatpush.msra.mxu0 %v2110
    %2160 = vmatpush.msra.mxu0 %v2109
    %2161 = vmatmul.f32.gmra.mxu0 %v2105
    %v2162 = vpop.f32.mrf.mxu0
    %v2163 = vadd.f32 %v2143, %v2162
    %2164 = vdwg.mxu0
    %2165 = vmatpush.msra.mxu0 %v2140
    %2166 = vmatpush.msra.mxu0 %v2139
    %2167 = vmatpush.msra.mxu0 %v2138
    %2168 = vmatpush.msra.mxu0 %v2137
    %2169 = vmatpush.msra.mxu0 %v2136
    %2170 = vmatpush.msra.mxu0 %v2135
    %2171 = vmatpush.msra.mxu0 %v2134
    %2172 = vmatpush.msra.mxu0 %v2133
    %2173 = vmatpush.msra.mxu0 %v2132
    %2174 = vmatpush.msra.mxu0 %v2131
    %2175 = vmatpush.msra.mxu0 %v2130
    %2176 = vmatpush.msra.mxu0 %v2129
    %2177 = vmatpush.msra.mxu0 %v2128
    %2178 = vmatpush.msra.mxu0 %v2127
    %2179 = vmatpush.msra.mxu0 %v2126
    %2180 = vmatpush.msra.mxu0 %v2125
    %2181 = vmatmul.f32.gmra.mxu0 %v2106
    %v2182 = vpop.f32.mrf.mxu0
    %v2183 = vadd.f32 %v2163, %v2182
    %2184 = vdwg.mxu0
    %2185 = vst [vmem:[#allocation11] sm:$0xff] %v2183
    // Predicated region
    $region38: #{tpu_custom_call.1} parent=1 // pred_check
      _
    $region39: #{tpu_custom_call.1} parent=1 // pred_check_branch
      %2187 = sbr.rel (0) target = $region41
    $region40: #{tpu_custom_call.1} parent=1 // pred_region
      %2189 = vsyncadd [#allocation4], 0
      %s2191 = sshll.u32 [#allocation10], 4
      %s2192 = int_to_ptr.vmem [resolvable:$true] %s2191
      %s2193 = sshll.u32 %s5, 4
      %s2194 = int_to_ptr.hbm [resolvable:$true] %s2193
      %2196 = dma.vmem_to_hbm [thread:$0]  %s2192, 256, %s2194, [#allocation4]
    $region41: #{tpu_custom_call.1} parent=1 // pred_fallthru
      _
    // Predicated region
    $region42: #{tpu_custom_call.1} parent=1 // pred_check
      _
    $region43: #{tpu_custom_call.1} parent=1 // pred_check_branch
      %2198 = sbr.rel (0) target = $region45
    $region44: #{tpu_custom_call.1} parent=1 // pred_region
      %2200 = vsyncadd [#allocation12], 0
      %s2202 = sshll.u32 [#allocation11], 4
      %s2203 = int_to_ptr.vmem [resolvable:$true] %s2202
      %s2204 = sshll.u32 %s6, 4
      %s2205 = int_to_ptr.hbm [resolvable:$true] %s2204
      %2207 = dma.vmem_to_hbm [thread:$0]  %s2203, 128, %s2205, [#allocation12]
    $region45: #{tpu_custom_call.1} parent=1 // pred_fallthru
      _
    // Predicated region
    $region46: #{tpu_custom_call.1} parent=1 // pred_check
      _
    $region47: #{tpu_custom_call.1} parent=1 // pred_check_branch
      %2209 = sbr.rel (0) target = $region49
    $region48: #{tpu_custom_call.1} parent=1 // pred_region
      %2211 = dma.done [#allocation4], 256
    $region49: #{tpu_custom_call.1} parent=1 // pred_fallthru
      _
    // Predicated region
    $region50: #{tpu_custom_call.1} parent=1 // pred_check
      _
    $region51: #{tpu_custom_call.1} parent=1 // pred_check_branch
      %2213 = sbr.rel (0) target = $region53
    $region52: #{tpu_custom_call.1} parent=1 // pred_region
      %2215 = dma.done [#allocation12], 128
    $region53: #{tpu_custom_call.1} parent=1 // pred_fallthru
      _
    %2216 = vsyncpa [#allocation3], 1
    %2217 = vsyncpa [#allocation6], 1
    %2218 = vsyncpa [#allocation9], 1
    %2219 = vsyncpa [#allocation4], 1
    %2220 = vsyncpa [#allocation12], 1

</llo_original>
